<compile_context>
chip_gen: v5e
topology: v5e:2x2
jax: 0.10.0
libtpu: 0.0.40
codegen_flags: <defaults>
</compile_context>

<pallas_src>
import functools

import jax
import jax.numpy as jnp
from jax.experimental import pallas as pl
from jax.experimental.pallas import tpu as pltpu

# Row offset of the fc2 block inside the packed weight slab (W1^T rows + the b1 row
# fit inside the first sublane tile of 8 rows for CartPole-sized state_dim).
_W2_ROW = 8


def _actor_kernel(x_ref, slab_ref, o_ref, *, state_dim, hidden_dim, action_dim):
    S, H, A = state_dim, hidden_dim, action_dim
    x = x_ref[...]                                   # (TILE_B, S), natural layout

    # ---- fc1 + bias + relu: S broadcast-FMAs on the VPU ------------------------
    # Single load of W1^T rows + b1; slice the loaded value inside the unrolled loop
    # (review: avoid S+1 separate narrow ref loads).
    w1b = slab_ref[0:S + 1, 0:H]                     # (S+1, H): rows 0..S-1 = W1^T, row S = b1
    acc = x[:, 0:1] * w1b[0:1, :]                    # (TB,1)*(1,H) -> (TB,H)
    for k in range(1, S):
        acc = acc + x[:, k:k + 1] * w1b[k:k + 1, :]
    h = jnp.maximum(acc + w1b[S:S + 1, :], 0.0)      # (TB, H)

    # ---- fc2 on the MXU (K = hidden).  W2^T is pre-padded to 128 lanes ---------
    w2 = slab_ref[_W2_ROW:_W2_ROW + H, :]            # (H, 128), lanes >= A are zero
    logits_full = jnp.dot(h, w2, preferred_element_type=jnp.float32)   # (TB, 128)
    b2 = slab_ref[_W2_ROW + H:_W2_ROW + H + 1, 0:A]  # (1, A)
    logits = logits_full[:, 0:A] + b2                # (TB, A)

    # ---- softmax over the (tiny, static) action axis: explicit lane ops --------
    m = logits[:, 0:1]
    for a in range(1, A):
        m = jnp.maximum(m, logits[:, a:a + 1])
    e = jnp.exp(logits - m)                          # EUP
    den = e[:, 0:1]
    for a in range(1, A):
        den = den + e[:, a:a + 1]
    # exact reciprocal (approx=True would break the 1e-5 sum-to-one tolerance)
    o_ref[...] = (e * pl.reciprocal(den)).astype(o_ref.dtype)


def pack_params(w1, b1, w2, b2):
    """Pack PyTorch-layout params (fc1.weight (H,S), fc1.bias (H,), fc2.weight (A,H),
    fc2.bias (A,)) into one lane-aligned f32 slab:
        rows 0..S-1 , lanes 0..H-1 : W1^T
        row  S      , lanes 0..H-1 : b1
        rows 8..8+H-1, lanes 0..127: W2^T  (lanes >= A are zero -> lane-full MXU matmul)
        row  8+H    , lanes 0..A-1 : b2
    """
    H, S = w1.shape
    A, H2 = w2.shape
    assert H2 == H
    assert S + 1 <= _W2_ROW, "state_dim too large for this slab layout"
    assert H <= 128 and A <= 128, "hidden/action dim too large for this slab layout"
    rows = ((_W2_ROW + H + 1 + 7) // 8) * 8
    slab = jnp.zeros((rows, 128), jnp.float32)
    slab = slab.at[0:S, 0:H].set(w1.T.astype(jnp.float32))                       # W1^T
    slab = slab.at[S, 0:H].set(b1.astype(jnp.float32))                           # b1
    slab = slab.at[_W2_ROW:_W2_ROW + H, 0:A].set(w2.T.astype(jnp.float32))       # W2^T
    slab = slab.at[_W2_ROW + H, 0:A].set(b2.astype(jnp.float32))                 # b2
    return slab


def _choose_tile(batch, max_tile):
    """Biggest-reasonable batch tile: grid overhead (~0.35us/step) dominates tiny tiles.
    For batches > 128 use two balanced tiles so v7x's two TensorCores both get work
    (one extra step is negligible on single-TC v5e/v6e); cap at max_tile."""
    def rup(x, m):
        return ((x + m - 1) // m) * m
    bp = rup(max(batch, 1), 128)
    if bp <= 128:
        return 128
    return min(rup(-(-bp // 2), 128), max_tile)


def actor_forward(state, slab, *, state_dim, hidden_dim, action_dim, max_tile=4096):
    """state: (B, state_dim) f32 -> action probabilities (B, action_dim) f32."""
    B, S = state.shape
    assert S == state_dim
    if state.dtype != jnp.float32:
        state = state.astype(jnp.float32)

    tile_b = _choose_tile(B, max_tile)
    n_tiles = pl.cdiv(B, tile_b)           # no wrapper pad: Pallas handles the partial last block

    kernel = functools.partial(
        _actor_kernel, state_dim=state_dim, hidden_dim=hidden_dim, action_dim=action_dim)

    return pl.pallas_call(
        kernel,
        out_shape=jax.ShapeDtypeStruct((B, action_dim), jnp.float32),
        grid=(n_tiles,),
        in_specs=[
            pl.BlockSpec((tile_b, state_dim), lambda i: (i, 0)),   # per-tile state (natural layout)
            pl.BlockSpec(slab.shape, lambda i: (0, 0)),            # weight slab, VMEM-resident
        ],
        out_specs=pl.BlockSpec((tile_b, action_dim), lambda i: (i, 0)),
        compiler_params=pltpu.CompilerParams(
            dimension_semantics=("parallel",),       # v7x: shard the batch tiles over both TCs
        ),
    )(state, slab)


def init_params(key, state_dim, hidden_dim, action_dim):
    """Deterministic init mimicking nn.Linear's U(-1/sqrt(fan_in), 1/sqrt(fan_in)),
    stored in PyTorch layout: weight (out, in), bias (out,)."""
    k1, k2, k3, k4 = jax.random.split(key, 4)
    lim1 = 1.0 / jnp.sqrt(jnp.float32(state_dim))
    lim2 = 1.0 / jnp.sqrt(jnp.float32(hidden_dim))
    w1 = jax.random.uniform(k1, (hidden_dim, state_dim), jnp.float32, -lim1, lim1)
    b1 = jax.random.uniform(k2, (hidden_dim,), jnp.float32, -lim1, lim1)
    w2 = jax.random.uniform(k3, (action_dim, hidden_dim), jnp.float32, -lim2, lim2)
    b2 = jax.random.uniform(k4, (action_dim,), jnp.float32, -lim2, lim2)
    return w1, b1, w2, b2


if __name__ == "__main__":
    # CartPole-v1: state_dim=4, action_dim=2, hidden_dim=64 (module defaults).
    state_dim, hidden_dim, action_dim = 4, 64, 2

    key = jax.random.PRNGKey(0)
    kx, kp = jax.random.split(key)
    w1, b1, w2, b2 = init_params(kp, state_dim, hidden_dim, action_dim)
    slab = pack_params(w1, b1, w2, b2)

    fwd = jax.jit(functools.partial(
        actor_forward, state_dim=state_dim, hidden_dim=hidden_dim, action_dim=action_dim))

    hi = jax.lax.Precision.HIGHEST

    def ref_fwd(s):
        h = jnp.maximum(jnp.dot(s, w1.T, precision=hi) + b1, 0.0)
        return jax.nn.softmax(jnp.dot(h, w2.T, precision=hi) + b2, axis=-1)

    # 512 -> two full 256-row tiles; 384 -> exercises the partial last block (no wrapper pad).
    for batch in (512, 384):
        s = jax.random.normal(jax.random.fold_in(kx, batch), (batch, state_dim), jnp.float32)
        probs = jax.block_until_ready(fwd(s, slab))
        assert probs.shape == (batch, action_dim)
        assert jnp.allclose(probs, ref_fwd(s), atol=1e-5, rtol=1e-5)
        assert jnp.allclose(jnp.sum(probs, axis=-1), 1.0, atol=1e-5)

    print("KERNEL_OK")
</pallas_src>

<mosaic_0001>
module attributes {stable_mosaic.version = 11 : i64} {
  func.func @_actor_kernel(%arg0: i32, %arg1: memref<256x4xf32, #tpu.memory_space<vmem>>, %arg2: memref<80x128xf32, #tpu.memory_space<vmem>>, %arg3: memref<256x2xf32, #tpu.memory_space<vmem>>) attributes {dimension_semantics = [#tpu.dimension_semantics<parallel>], iteration_bounds = array<i64: 2>, scalar_prefetch = 0 : i64, scratch_operands = 0 : i64, tpu.core_type = #tpu.core_type<tc>, window_params = [{transform_indices = @transform_0, window_bounds = array<i64: 256, 4>}, {pipeline_mode = #tpu.pipeline_mode<synchronous>, transform_indices = @transform_1, window_bounds = array<i64: 80, 128>}, {transform_indices = @transform_2, window_bounds = array<i64: 256, 2>}]} {
    %c0 = arith.constant 0 : index
    %c0_0 = arith.constant 0 : index
    %0 = vector.load %arg1[%c0, %c0_0] : memref<256x4xf32, #tpu.memory_space<vmem>>, vector<256x4xf32>
    %c0_1 = arith.constant 0 : index
    %c0_2 = arith.constant 0 : index
    %1 = vector.load %arg2[%c0_1, %c0_2] : memref<80x128xf32, #tpu.memory_space<vmem>>, vector<5x64xf32>
    %2 = vector.extract_strided_slice %0 {offsets = [0, 0], sizes = [256, 1], strides = [1, 1]} : vector<256x4xf32> to vector<256x1xf32>
    %3 = vector.extract_strided_slice %1 {offsets = [0, 0], sizes = [1, 64], strides = [1, 1]} : vector<5x64xf32> to vector<1x64xf32>
    %4 = vector.broadcast %2 : vector<256x1xf32> to vector<256x64xf32>
    %5 = vector.broadcast %3 : vector<1x64xf32> to vector<256x64xf32>
    %6 = arith.mulf %4, %5 : vector<256x64xf32>
    %7 = vector.extract_strided_slice %0 {offsets = [0, 1], sizes = [256, 1], strides = [1, 1]} : vector<256x4xf32> to vector<256x1xf32>
    %8 = vector.extract_strided_slice %1 {offsets = [1, 0], sizes = [1, 64], strides = [1, 1]} : vector<5x64xf32> to vector<1x64xf32>
    %9 = vector.broadcast %7 : vector<256x1xf32> to vector<256x64xf32>
    %10 = vector.broadcast %8 : vector<1x64xf32> to vector<256x64xf32>
    %11 = arith.mulf %9, %10 : vector<256x64xf32>
    %12 = arith.addf %6, %11 : vector<256x64xf32>
    %13 = vector.extract_strided_slice %0 {offsets = [0, 2], sizes = [256, 1], strides = [1, 1]} : vector<256x4xf32> to vector<256x1xf32>
    %14 = vector.extract_strided_slice %1 {offsets = [2, 0], sizes = [1, 64], strides = [1, 1]} : vector<5x64xf32> to vector<1x64xf32>
    %15 = vector.broadcast %13 : vector<256x1xf32> to vector<256x64xf32>
    %16 = vector.broadcast %14 : vector<1x64xf32> to vector<256x64xf32>
    %17 = arith.mulf %15, %16 : vector<256x64xf32>
    %18 = arith.addf %12, %17 : vector<256x64xf32>
    %19 = vector.extract_strided_slice %0 {offsets = [0, 3], sizes = [256, 1], strides = [1, 1]} : vector<256x4xf32> to vector<256x1xf32>
    %20 = vector.extract_strided_slice %1 {offsets = [3, 0], sizes = [1, 64], strides = [1, 1]} : vector<5x64xf32> to vector<1x64xf32>
    %21 = vector.broadcast %19 : vector<256x1xf32> to vector<256x64xf32>
    %22 = vector.broadcast %20 : vector<1x64xf32> to vector<256x64xf32>
    %23 = arith.mulf %21, %22 : vector<256x64xf32>
    %24 = arith.addf %18, %23 : vector<256x64xf32>
    %25 = vector.extract_strided_slice %1 {offsets = [4, 0], sizes = [1, 64], strides = [1, 1]} : vector<5x64xf32> to vector<1x64xf32>
    %26 = vector.broadcast %25 : vector<1x64xf32> to vector<256x64xf32>
    %27 = arith.addf %24, %26 : vector<256x64xf32>
    %cst = arith.constant 0.000000e+00 : f32
    %28 = vector.broadcast %cst : f32 to vector<256x64xf32>
    %29 = arith.maximumf %27, %28 : vector<256x64xf32>
    %c8 = arith.constant 8 : index
    %c0_3 = arith.constant 0 : index
    %30 = vector.load %arg2[%c8, %c0_3] : memref<80x128xf32, #tpu.memory_space<vmem>>, vector<64x128xf32>
    %cst_4 = arith.constant dense<0.000000e+00> : vector<256x128xf32>
    %31 = tpu.matmul %29, %30, %cst_4 {dimension_numbers = #tpu.dot_dimension_numbers<[1], [0], [0], [1], [0, 0, 1, 1], [], []>} : vector<256x64xf32>, vector<64x128xf32>, vector<256x128xf32> -> vector<256x128xf32>
    %c72 = arith.constant 72 : index
    %c0_5 = arith.constant 0 : index
    %32 = vector.load %arg2[%c72, %c0_5] : memref<80x128xf32, #tpu.memory_space<vmem>>, vector<1x2xf32>
    %33 = vector.extract_strided_slice %31 {offsets = [0, 0], sizes = [256, 2], strides = [1, 1]} : vector<256x128xf32> to vector<256x2xf32>
    %34 = vector.broadcast %32 : vector<1x2xf32> to vector<256x2xf32>
    %35 = arith.addf %33, %34 : vector<256x2xf32>
    %36 = vector.extract_strided_slice %35 {offsets = [0, 0], sizes = [256, 1], strides = [1, 1]} : vector<256x2xf32> to vector<256x1xf32>
    %37 = vector.extract_strided_slice %35 {offsets = [0, 1], sizes = [256, 1], strides = [1, 1]} : vector<256x2xf32> to vector<256x1xf32>
    %38 = arith.maximumf %36, %37 : vector<256x1xf32>
    %39 = vector.broadcast %38 : vector<256x1xf32> to vector<256x2xf32>
    %40 = arith.subf %35, %39 : vector<256x2xf32>
    %41 = math.exp %40 : vector<256x2xf32>
    %42 = vector.extract_strided_slice %41 {offsets = [0, 0], sizes = [256, 1], strides = [1, 1]} : vector<256x2xf32> to vector<256x1xf32>
    %43 = vector.extract_strided_slice %41 {offsets = [0, 1], sizes = [256, 1], strides = [1, 1]} : vector<256x2xf32> to vector<256x1xf32>
    %44 = arith.addf %42, %43 : vector<256x1xf32>
    %45 = tpu.reciprocal %44 : vector<256x1xf32> -> vector<256x1xf32>
    %46 = vector.broadcast %45 : vector<256x1xf32> to vector<256x2xf32>
    %47 = arith.mulf %41, %46 : vector<256x2xf32>
    %c0_6 = arith.constant 0 : index
    %c0_7 = arith.constant 0 : index
    %48 = vector.load %arg3[%c0_6, %c0_7] : memref<256x2xf32, #tpu.memory_space<vmem>>, vector<256x2xf32>
    tpu.vector_store %arg3[%c0_6, %c0_7], %47 {strides = array<i32>} : memref<256x2xf32, #tpu.memory_space<vmem>>, vector<256x2xf32>,
    return
  }
  func.func @transform_0(%arg0: i32) -> (i32, i32) {
    %c0_i32 = arith.constant 0 : i32
    %c0_i32_0 = arith.constant 0 : i32
    return %arg0, %c0_i32 : i32, i32
  }
  func.func @transform_1(%arg0: i32) -> (i32, i32) {
    %c0_i32 = arith.constant 0 : i32
    %c0_i32_0 = arith.constant 0 : i32
    %c0_i32_1 = arith.constant 0 : i32
    return %c0_i32, %c0_i32_0 : i32, i32
  }
  func.func @transform_2(%arg0: i32) -> (i32, i32) {
    %c0_i32 = arith.constant 0 : i32
    %c0_i32_0 = arith.constant 0 : i32
    return %arg0, %c0_i32 : i32, i32
  }
}

</mosaic_0001>

<llo_original>
// kernel: actor_forward.1
$region0: #{actor_forward.1}
  #allocation0 [shape = 'u32[]', space=smem, size = 0x4, offset = 0x4, fixed_abs, tag = 'smem constant byte address 0x4 - core index']
  #allocation1 [shape = 'u32[72,128]{1,0:T(1,128)}', space=vmem, size = 0x9000, scoped, tag = 'internal scratch']
  %s0 = inlined_call_operand.vmem [shape: f32[512,4], index: 0, kind: input, shape index: {}]
  %s1 = inlined_call_operand.vmem [shape: f32[80,128], index: 1, kind: input, shape index: {}]
  %s2 = inlined_call_operand.vmem [shape: f32[512,2], index: 2, kind: output, shape index: {}]
  %s3 = sld [smem:[#allocation0]]
  $region41: #{actor_forward.1} parent=0
    _
  %s5 = ssub.s32 1, %s3
  %s6 = scalar_select 0, %s5, %s3
  loop: start=0, step=1, limit=4
  $region2: #{actor_forward.1} parent=0 // loop_pre_header
    _
  $region3: #{actor_forward.1} parent=0 // loop_header
    %s8 = sphi 0, %s12
    %p9 = scmp.ge.s32.totalorder %s8, 4
    %s18 = sphi 0, %s20
    %s21 = sphi 0, %s18
    %s22 = sphi 0, %s21
    %s38 = sphi 0, %s22
    %s42 = sphi 0, %s42
    %s44 = sphi 0, %s42
    %s45 = sphi 0, %s44
    %s59 = sphi 0, %s45
    %s65 = sphi 0, %s67
    %s68 = sphi 0, %s65
    %s69 = sphi 0, %s68
    %s85 = sphi 0, %s69
  $region4: #{actor_forward.1} parent=0 // loop_header_branch
    %11 = sbr.rel (%p9) target = $region8
  $region5: #{actor_forward.1} parent=0 // loop_body
    %s13 = ssub.s32 %s8, 1
    %s14 = ssub.s32 %s8, 2
    %s15 = sadd.s32 %s8, 1
    %s16 = ssub.s32 %s8, %s15
    %p17 = scmp.eq.s32.totalorder %s16, 0
    %s19 = sadd.s32 %s18, 1
    %s20 = scalar_select %p17, %s18, %s19
    %p23 = pneg %p17
    %p24 = scmp.eq.s32.totalorder %s8, 1
    %p25 = por %p23, %p24
    %p26 = scmp.ne.s32.totalorder %s18, %s21
    %p27 = scmp.eq.s32.totalorder %s8, 0
    %p28 = por %p26, %p27
    %p29 = scmp.ne.s32.totalorder %s18, %s21
    %p30 = scmp.eq.s32.totalorder %s13, 1
    %p31 = por %p29, %p30
    %p32 = scmp.ne.s32.totalorder %s21, %s22
    %p33 = scmp.eq.s32.totalorder %s13, 0
    %p34 = por %p32, %p33
    %p35 = scmp.ne.s32.totalorder %s21, %s22
    %p36 = scmp.eq.s32.totalorder %s14, 1
    %p37 = por %p35, %p36
    %p39 = scmp.ne.s32.totalorder %s22, %s38
    %p40 = scmp.eq.s32.totalorder %s14, 0
    %p41 = por %p39, %p40
    %s43 = sadd.s32 %s42, 1
    %p46 = scmp.eq.s32.totalorder %s8, 1
    %p47 = scmp.ne.s32.totalorder %s42, %s44
    %p48 = scmp.eq.s32.totalorder %s8, 0
    %p49 = por %p47, %p48
    %p50 = scmp.ne.s32.totalorder %s42, %s44
    %p51 = scmp.eq.s32.totalorder %s13, 1
    %p52 = por %p50, %p51
    %p53 = scmp.ne.s32.totalorder %s44, %s45
    %p54 = scmp.eq.s32.totalorder %s13, 0
    %p55 = por %p53, %p54
    %p56 = scmp.ne.s32.totalorder %s44, %s45
    %p57 = scmp.eq.s32.totalorder %s14, 1
    %p58 = por %p56, %p57
    %p60 = scmp.ne.s32.totalorder %s45, %s59
    %p61 = scmp.eq.s32.totalorder %s14, 0
    %p62 = por %p60, %p61
    %s63 = ssub.s32 %s8, %s15
    %p64 = scmp.eq.s32.totalorder %s63, 0
    %s66 = sadd.s32 %s65, 1
    %s67 = scalar_select %p64, %s65, %s66
    %p70 = pneg %p64
    %p71 = scmp.eq.s32.totalorder %s8, 1
    %p72 = por %p70, %p71
    %p73 = scmp.ne.s32.totalorder %s65, %s68
    %p74 = scmp.eq.s32.totalorder %s8, 0
    %p75 = por %p73, %p74
    %p76 = scmp.ne.s32.totalorder %s65, %s68
    %p77 = scmp.eq.s32.totalorder %s13, 1
    %p78 = por %p76, %p77
    %p79 = scmp.ne.s32.totalorder %s68, %s69
    %p80 = scmp.eq.s32.totalorder %s13, 0
    %p81 = por %p79, %p80
    %p82 = scmp.ne.s32.totalorder %s68, %s69
    %p83 = scmp.eq.s32.totalorder %s14, 1
    %p84 = por %p82, %p83
    %p86 = scmp.ne.s32.totalorder %s69, %s85
    %p87 = scmp.eq.s32.totalorder %s14, 0
    %p88 = por %p86, %p87
    %p89 = scmp.le.s32.totalorder 1, %s8
    %p90 = scmp.lt.s32.totalorder %s8, 3
    %p91 = pnand %p89, %p90
    %p92 = pneg %p91
    // Predicated region
    $region9: #{actor_forward.1} parent=5 // pred_check
      _
    $region10: #{actor_forward.1} parent=5 // pred_check_branch
      %94 = sbr.rel (%p91) target = $region12
    $region11: #{actor_forward.1} parent=5 // pred_region
      %s95 = ssub.s32 %s8, 1
      // Predicated region
      $region13: #{actor_forward.1} parent=11 // pred_check
        %p96 = pneg %p55
      $region14: #{actor_forward.1} parent=11 // pred_check_branch
        %98 = sbr.rel (%p96) target = $region16
      $region15: #{actor_forward.1} parent=11 // pred_region
        _
      $region16: #{actor_forward.1} parent=11 // pred_fallthru
        _
    $region12: #{actor_forward.1} parent=5 // pred_fallthru
      _
    %p99 = scmp.lt.s32.totalorder %s8, 2
    // Predicated region
    $region17: #{actor_forward.1} parent=5 // pred_check
      %p100 = pneg %p99
    $region18: #{actor_forward.1} parent=5 // pred_check_branch
      %102 = sbr.rel (%p100) target = $region20
    $region19: #{actor_forward.1} parent=5 // pred_region
      // Predicated region
      $region21: #{actor_forward.1} parent=19 // pred_check
        %p103 = pneg %p28
      $region22: #{actor_forward.1} parent=19 // pred_check_branch
        %105 = sbr.rel (%p103) target = $region24
      $region23: #{actor_forward.1} parent=19 // pred_region
        %s106 = smul.u32 32, %s8
        %p107 = scmp.lt.s32.totalorder %s106, 63
        %s108 = scalar_select %p107, %s106, 63
        %s109 = smul.addr %s108, 8
        %s110 = scalar_lea.vmem %s0, %s109
        %s111 = smul.u32 32, %s8
      $region24: #{actor_forward.1} parent=19 // pred_fallthru
        _
    $region20: #{actor_forward.1} parent=5 // pred_fallthru
      _
    %p112 = scmp.le.s32.totalorder 1, %s8
    %p113 = scmp.lt.s32.totalorder %s8, 3
    %p114 = pnand %p112, %p113
    %p115 = pneg %p114
    // Predicated region
    $region25: #{actor_forward.1} parent=5 // pred_check
      _
    $region26: #{actor_forward.1} parent=5 // pred_check_branch
      %117 = sbr.rel (%p114) target = $region28
    $region27: #{actor_forward.1} parent=5 // pred_region
      %s118 = ssub.s32 %s8, 1
      %s119 = smul.u32 32, %s13
      %p120 = scmp.lt.s32.totalorder %s119, 63
      %s121 = scalar_select %p120, %s119, 63
      %s122 = smul.addr %s121, 8
      %s123 = scalar_lea.vmem %s0, %s122
      %p124 = pneg %p34
      %p125 = pneg %p31
      %p126 = pneg %p55
      %p127 = pneg %p52
      %p128 = pneg %p81
      %p129 = pneg %p78
      %s130 = smul.u32 32, %s13
      %p131 = scmp.lt.s32.totalorder %s130, 63
      %s132 = scalar_select %p131, %s130, 63
      %s133 = smul.addr %s132, 8
      %s134 = scalar_lea.vmem %s2, %s133
      %s135 = smul.u32 32, %s13
      %p136 = scmp.lt.s32.totalorder %s135, 63
      %s137 = scalar_select %p136, %s135, 63
      %s138 = smul.addr %s137, 8
      %s139 = scalar_lea.vmem %s0, %s138
      %s140 = smul.u32 32, %s13
      %s141 = smul.u32 32, %s13
      %p142 = scmp.lt.s32.totalorder %s141, 63
      %s143 = scalar_select %p142, %s141, 63
      %s144 = smul.addr %s143, 8
      %s145 = scalar_lea.vmem %s2, %s144
      %s146 = smul.u32 32, %s13
      %v147 = vld [vmem:[%s139] sm:$0xff]
      %v148 = vld [vmem:[%s139 + $0x8] sm:$0xff]
      %v149 = vld [vmem:[%s139 + $0x10] sm:$0xff]
      %v150 = vld [vmem:[%s139 + $0x18] sm:$0xff]
      %v151 = vld [vmem:[%s139 + $0x20] sm:$0xff]
      %v152 = vld [vmem:[%s139 + $0x28] sm:$0xff]
      %v153 = vld [vmem:[%s139 + $0x30] sm:$0xff]
      %v154 = vld [vmem:[%s139 + $0x38] sm:$0xff]
      %v155 = vld [vmem:[%s139 + $0x40] sm:$0xff]
      %v156 = vld [vmem:[%s139 + $0x48] sm:$0xff]
      %v157 = vld [vmem:[%s139 + $0x50] sm:$0xff]
      %v158 = vld [vmem:[%s139 + $0x58] sm:$0xff]
      %v159 = vld [vmem:[%s139 + $0x60] sm:$0xff]
      %v160 = vld [vmem:[%s139 + $0x68] sm:$0xff]
      %v161 = vld [vmem:[%s139 + $0x70] sm:$0xff]
      %v162 = vld [vmem:[%s139 + $0x78] sm:$0xff]
      %v163 = vld [vmem:[%s139 + $0x80] sm:$0xff]
      %v164 = vld [vmem:[%s139 + $0x88] sm:$0xff]
      %v165 = vld [vmem:[%s139 + $0x90] sm:$0xff]
      %v166 = vld [vmem:[%s139 + $0x98] sm:$0xff]
      %v167 = vld [vmem:[%s139 + $0xa0] sm:$0xff]
      %v168 = vld [vmem:[%s139 + $0xa8] sm:$0xff]
      %v169 = vld [vmem:[%s139 + $0xb0] sm:$0xff]
      %v170 = vld [vmem:[%s139 + $0xb8] sm:$0xff]
      %v171 = vld [vmem:[%s139 + $0xc0] sm:$0xff]
      %v172 = vld [vmem:[%s139 + $0xc8] sm:$0xff]
      %v173 = vld [vmem:[%s139 + $0xd0] sm:$0xff]
      %v174 = vld [vmem:[%s139 + $0xd8] sm:$0xff]
      %v175 = vld [vmem:[%s139 + $0xe0] sm:$0xff]
      %v176 = vld [vmem:[%s139 + $0xe8] sm:$0xff]
      %v177 = vld [vmem:[%s139 + $0xf0] sm:$0xff]
      %v178 = vld [vmem:[%s139 + $0xf8] sm:$0xff]
      %v179 = vld [vmem:[%s1] sm:$0x1f]
      %181 = vset.pattern.permute.xlu0 0
      %182 = vperm.xlu0 %181, %v147
      %v183 = vpop.permute.xlu0 %182
      %186 = vset.pattern.permute.xlu0 0
      %187 = vperm.xlu0 %186, %v148
      %v188 = vpop.permute.xlu0 %187
      %191 = vset.pattern.permute.xlu0 0
      %192 = vperm.xlu0 %191, %v149
      %v193 = vpop.permute.xlu0 %192
      %196 = vset.pattern.permute.xlu0 0
      %197 = vperm.xlu0 %196, %v150
      %v198 = vpop.permute.xlu0 %197
      %201 = vset.pattern.permute.xlu0 0
      %202 = vperm.xlu0 %201, %v151
      %v203 = vpop.permute.xlu0 %202
      %206 = vset.pattern.permute.xlu0 0
      %207 = vperm.xlu0 %206, %v152
      %v208 = vpop.permute.xlu0 %207
      %211 = vset.pattern.permute.xlu0 0
      %212 = vperm.xlu0 %211, %v153
      %v213 = vpop.permute.xlu0 %212
      %216 = vset.pattern.permute.xlu0 0
      %217 = vperm.xlu0 %216, %v154
      %v218 = vpop.permute.xlu0 %217
      %221 = vset.pattern.permute.xlu0 0
      %222 = vperm.xlu0 %221, %v155
      %v223 = vpop.permute.xlu0 %222
      %226 = vset.pattern.permute.xlu0 0
      %227 = vperm.xlu0 %226, %v156
      %v228 = vpop.permute.xlu0 %227
      %231 = vset.pattern.permute.xlu0 0
      %232 = vperm.xlu0 %231, %v157
      %v233 = vpop.permute.xlu0 %232
      %236 = vset.pattern.permute.xlu0 0
      %237 = vperm.xlu0 %236, %v158
      %v238 = vpop.permute.xlu0 %237
      %241 = vset.pattern.permute.xlu0 0
      %242 = vperm.xlu0 %241, %v159
      %v243 = vpop.permute.xlu0 %242
      %246 = vset.pattern.permute.xlu0 0
      %247 = vperm.xlu0 %246, %v160
      %v248 = vpop.permute.xlu0 %247
      %251 = vset.pattern.permute.xlu0 0
      %252 = vperm.xlu0 %251, %v161
      %v253 = vpop.permute.xlu0 %252
      %256 = vset.pattern.permute.xlu0 0
      %257 = vperm.xlu0 %256, %v162
      %v258 = vpop.permute.xlu0 %257
      %261 = vset.pattern.permute.xlu0 0
      %262 = vperm.xlu0 %261, %v163
      %v263 = vpop.permute.xlu0 %262
      %266 = vset.pattern.permute.xlu0 0
      %267 = vperm.xlu0 %266, %v164
      %v268 = vpop.permute.xlu0 %267
      %271 = vset.pattern.permute.xlu0 0
      %272 = vperm.xlu0 %271, %v165
      %v273 = vpop.permute.xlu0 %272
      %276 = vset.pattern.permute.xlu0 0
      %277 = vperm.xlu0 %276, %v166
      %v278 = vpop.permute.xlu0 %277
      %281 = vset.pattern.permute.xlu0 0
      %282 = vperm.xlu0 %281, %v167
      %v283 = vpop.permute.xlu0 %282
      %286 = vset.pattern.permute.xlu0 0
      %287 = vperm.xlu0 %286, %v168
      %v288 = vpop.permute.xlu0 %287
      %291 = vset.pattern.permute.xlu0 0
      %292 = vperm.xlu0 %291, %v169
      %v293 = vpop.permute.xlu0 %292
      %296 = vset.pattern.permute.xlu0 0
      %297 = vperm.xlu0 %296, %v170
      %v298 = vpop.permute.xlu0 %297
      %301 = vset.pattern.permute.xlu0 0
      %302 = vperm.xlu0 %301, %v171
      %v303 = vpop.permute.xlu0 %302
      %306 = vset.pattern.permute.xlu0 0
      %307 = vperm.xlu0 %306, %v172
      %v308 = vpop.permute.xlu0 %307
      %311 = vset.pattern.permute.xlu0 0
      %312 = vperm.xlu0 %311, %v173
      %v313 = vpop.permute.xlu0 %312
      %316 = vset.pattern.permute.xlu0 0
      %317 = vperm.xlu0 %316, %v174
      %v318 = vpop.permute.xlu0 %317
      %321 = vset.pattern.permute.xlu0 0
      %322 = vperm.xlu0 %321, %v175
      %v323 = vpop.permute.xlu0 %322
      %326 = vset.pattern.permute.xlu0 0
      %327 = vperm.xlu0 %326, %v176
      %v328 = vpop.permute.xlu0 %327
      %331 = vset.pattern.permute.xlu0 0
      %332 = vperm.xlu0 %331, %v177
      %v333 = vpop.permute.xlu0 %332
      %336 = vset.pattern.permute.xlu0 0
      %337 = vperm.xlu0 %336, %v178
      %v338 = vpop.permute.xlu0 %337
      %v340 = vperm.slane %v179, 0
      %v341 = vmul.f32 %v183, %v340
      %v342 = vmul.f32 %v188, %v340
      %v343 = vmul.f32 %v193, %v340
      %v344 = vmul.f32 %v198, %v340
      %v345 = vmul.f32 %v203, %v340
      %v346 = vmul.f32 %v208, %v340
      %v347 = vmul.f32 %v213, %v340
      %v348 = vmul.f32 %v218, %v340
      %v349 = vmul.f32 %v223, %v340
      %v350 = vmul.f32 %v228, %v340
      %v351 = vmul.f32 %v233, %v340
      %v352 = vmul.f32 %v238, %v340
      %v353 = vmul.f32 %v243, %v340
      %v354 = vmul.f32 %v248, %v340
      %v355 = vmul.f32 %v253, %v340
      %v356 = vmul.f32 %v258, %v340
      %v357 = vmul.f32 %v263, %v340
      %v358 = vmul.f32 %v268, %v340
      %v359 = vmul.f32 %v273, %v340
      %v360 = vmul.f32 %v278, %v340
      %v361 = vmul.f32 %v283, %v340
      %v362 = vmul.f32 %v288, %v340
      %v363 = vmul.f32 %v293, %v340
      %v364 = vmul.f32 %v298, %v340
      %v365 = vmul.f32 %v303, %v340
      %v366 = vmul.f32 %v308, %v340
      %v367 = vmul.f32 %v313, %v340
      %v368 = vmul.f32 %v318, %v340
      %v369 = vmul.f32 %v323, %v340
      %v370 = vmul.f32 %v328, %v340
      %v371 = vmul.f32 %v333, %v340
      %v372 = vmul.f32 %v338, %v340
      %373 = vset.pattern.permute.xlu0 1
      %374 = vperm.xlu0 %373, %v147
      %v375 = vpop.permute.xlu0 %374
      %377 = vset.pattern.permute.xlu0 1
      %378 = vperm.xlu0 %377, %v148
      %v379 = vpop.permute.xlu0 %378
      %381 = vset.pattern.permute.xlu0 1
      %382 = vperm.xlu0 %381, %v149
      %v383 = vpop.permute.xlu0 %382
      %385 = vset.pattern.permute.xlu0 1
      %386 = vperm.xlu0 %385, %v150
      %v387 = vpop.permute.xlu0 %386
      %389 = vset.pattern.permute.xlu0 1
      %390 = vperm.xlu0 %389, %v151
      %v391 = vpop.permute.xlu0 %390
      %393 = vset.pattern.permute.xlu0 1
      %394 = vperm.xlu0 %393, %v152
      %v395 = vpop.permute.xlu0 %394
      %397 = vset.pattern.permute.xlu0 1
      %398 = vperm.xlu0 %397, %v153
      %v399 = vpop.permute.xlu0 %398
      %401 = vset.pattern.permute.xlu0 1
      %402 = vperm.xlu0 %401, %v154
      %v403 = vpop.permute.xlu0 %402
      %405 = vset.pattern.permute.xlu0 1
      %406 = vperm.xlu0 %405, %v155
      %v407 = vpop.permute.xlu0 %406
      %409 = vset.pattern.permute.xlu0 1
      %410 = vperm.xlu0 %409, %v156
      %v411 = vpop.permute.xlu0 %410
      %413 = vset.pattern.permute.xlu0 1
      %414 = vperm.xlu0 %413, %v157
      %v415 = vpop.permute.xlu0 %414
      %417 = vset.pattern.permute.xlu0 1
      %418 = vperm.xlu0 %417, %v158
      %v419 = vpop.permute.xlu0 %418
      %421 = vset.pattern.permute.xlu0 1
      %422 = vperm.xlu0 %421, %v159
      %v423 = vpop.permute.xlu0 %422
      %425 = vset.pattern.permute.xlu0 1
      %426 = vperm.xlu0 %425, %v160
      %v427 = vpop.permute.xlu0 %426
      %429 = vset.pattern.permute.xlu0 1
      %430 = vperm.xlu0 %429, %v161
      %v431 = vpop.permute.xlu0 %430
      %433 = vset.pattern.permute.xlu0 1
      %434 = vperm.xlu0 %433, %v162
      %v435 = vpop.permute.xlu0 %434
      %437 = vset.pattern.permute.xlu0 1
      %438 = vperm.xlu0 %437, %v163
      %v439 = vpop.permute.xlu0 %438
      %441 = vset.pattern.permute.xlu0 1
      %442 = vperm.xlu0 %441, %v164
      %v443 = vpop.permute.xlu0 %442
      %445 = vset.pattern.permute.xlu0 1
      %446 = vperm.xlu0 %445, %v165
      %v447 = vpop.permute.xlu0 %446
      %449 = vset.pattern.permute.xlu0 1
      %450 = vperm.xlu0 %449, %v166
      %v451 = vpop.permute.xlu0 %450
      %453 = vset.pattern.permute.xlu0 1
      %454 = vperm.xlu0 %453, %v167
      %v455 = vpop.permute.xlu0 %454
      %457 = vset.pattern.permute.xlu0 1
      %458 = vperm.xlu0 %457, %v168
      %v459 = vpop.permute.xlu0 %458
      %461 = vset.pattern.permute.xlu0 1
      %462 = vperm.xlu0 %461, %v169
      %v463 = vpop.permute.xlu0 %462
      %465 = vset.pattern.permute.xlu0 1
      %466 = vperm.xlu0 %465, %v170
      %v467 = vpop.permute.xlu0 %466
      %469 = vset.pattern.permute.xlu0 1
      %470 = vperm.xlu0 %469, %v171
      %v471 = vpop.permute.xlu0 %470
      %473 = vset.pattern.permute.xlu0 1
      %474 = vperm.xlu0 %473, %v172
      %v475 = vpop.permute.xlu0 %474
      %477 = vset.pattern.permute.xlu0 1
      %478 = vperm.xlu0 %477, %v173
      %v479 = vpop.permute.xlu0 %478
      %481 = vset.pattern.permute.xlu0 1
      %482 = vperm.xlu0 %481, %v174
      %v483 = vpop.permute.xlu0 %482
      %485 = vset.pattern.permute.xlu0 1
      %486 = vperm.xlu0 %485, %v175
      %v487 = vpop.permute.xlu0 %486
      %489 = vset.pattern.permute.xlu0 1
      %490 = vperm.xlu0 %489, %v176
      %v491 = vpop.permute.xlu0 %490
      %493 = vset.pattern.permute.xlu0 1
      %494 = vperm.xlu0 %493, %v177
      %v495 = vpop.permute.xlu0 %494
      %497 = vset.pattern.permute.xlu0 1
      %498 = vperm.xlu0 %497, %v178
      %v499 = vpop.permute.xlu0 %498
      %v501 = vperm.slane %v179, 1
      %v502 = vmul.f32 %v375, %v501
      %v503 = vmul.f32 %v379, %v501
      %v504 = vmul.f32 %v383, %v501
      %v505 = vmul.f32 %v387, %v501
      %v506 = vmul.f32 %v391, %v501
      %v507 = vmul.f32 %v395, %v501
      %v508 = vmul.f32 %v399, %v501
      %v509 = vmul.f32 %v403, %v501
      %v510 = vmul.f32 %v407, %v501
      %v511 = vmul.f32 %v411, %v501
      %v512 = vmul.f32 %v415, %v501
      %v513 = vmul.f32 %v419, %v501
      %v514 = vmul.f32 %v423, %v501
      %v515 = vmul.f32 %v427, %v501
      %v516 = vmul.f32 %v431, %v501
      %v517 = vmul.f32 %v435, %v501
      %v518 = vmul.f32 %v439, %v501
      %v519 = vmul.f32 %v443, %v501
      %v520 = vmul.f32 %v447, %v501
      %v521 = vmul.f32 %v451, %v501
      %v522 = vmul.f32 %v455, %v501
      %v523 = vmul.f32 %v459, %v501
      %v524 = vmul.f32 %v463, %v501
      %v525 = vmul.f32 %v467, %v501
      %v526 = vmul.f32 %v471, %v501
      %v527 = vmul.f32 %v475, %v501
      %v528 = vmul.f32 %v479, %v501
      %v529 = vmul.f32 %v483, %v501
      %v530 = vmul.f32 %v487, %v501
      %v531 = vmul.f32 %v491, %v501
      %v532 = vmul.f32 %v495, %v501
      %v533 = vmul.f32 %v499, %v501
      %v534 = vadd.f32 %v341, %v502
      %v535 = vadd.f32 %v342, %v503
      %v536 = vadd.f32 %v343, %v504
      %v537 = vadd.f32 %v344, %v505
      %v538 = vadd.f32 %v345, %v506
      %v539 = vadd.f32 %v346, %v507
      %v540 = vadd.f32 %v347, %v508
      %v541 = vadd.f32 %v348, %v509
      %v542 = vadd.f32 %v349, %v510
      %v543 = vadd.f32 %v350, %v511
      %v544 = vadd.f32 %v351, %v512
      %v545 = vadd.f32 %v352, %v513
      %v546 = vadd.f32 %v353, %v514
      %v547 = vadd.f32 %v354, %v515
      %v548 = vadd.f32 %v355, %v516
      %v549 = vadd.f32 %v356, %v517
      %v550 = vadd.f32 %v357, %v518
      %v551 = vadd.f32 %v358, %v519
      %v552 = vadd.f32 %v359, %v520
      %v553 = vadd.f32 %v360, %v521
      %v554 = vadd.f32 %v361, %v522
      %v555 = vadd.f32 %v362, %v523
      %v556 = vadd.f32 %v363, %v524
      %v557 = vadd.f32 %v364, %v525
      %v558 = vadd.f32 %v365, %v526
      %v559 = vadd.f32 %v366, %v527
      %v560 = vadd.f32 %v367, %v528
      %v561 = vadd.f32 %v368, %v529
      %v562 = vadd.f32 %v369, %v530
      %v563 = vadd.f32 %v370, %v531
      %v564 = vadd.f32 %v371, %v532
      %v565 = vadd.f32 %v372, %v533
      %566 = vset.pattern.permute.xlu0 2
      %567 = vperm.xlu0 %566, %v147
      %v568 = vpop.permute.xlu0 %567
      %570 = vset.pattern.permute.xlu0 2
      %571 = vperm.xlu0 %570, %v148
      %v572 = vpop.permute.xlu0 %571
      %574 = vset.pattern.permute.xlu0 2
      %575 = vperm.xlu0 %574, %v149
      %v576 = vpop.permute.xlu0 %575
      %578 = vset.pattern.permute.xlu0 2
      %579 = vperm.xlu0 %578, %v150
      %v580 = vpop.permute.xlu0 %579
      %582 = vset.pattern.permute.xlu0 2
      %583 = vperm.xlu0 %582, %v151
      %v584 = vpop.permute.xlu0 %583
      %586 = vset.pattern.permute.xlu0 2
      %587 = vperm.xlu0 %586, %v152
      %v588 = vpop.permute.xlu0 %587
      %590 = vset.pattern.permute.xlu0 2
      %591 = vperm.xlu0 %590, %v153
      %v592 = vpop.permute.xlu0 %591
      %594 = vset.pattern.permute.xlu0 2
      %595 = vperm.xlu0 %594, %v154
      %v596 = vpop.permute.xlu0 %595
      %598 = vset.pattern.permute.xlu0 2
      %599 = vperm.xlu0 %598, %v155
      %v600 = vpop.permute.xlu0 %599
      %602 = vset.pattern.permute.xlu0 2
      %603 = vperm.xlu0 %602, %v156
      %v604 = vpop.permute.xlu0 %603
      %606 = vset.pattern.permute.xlu0 2
      %607 = vperm.xlu0 %606, %v157
      %v608 = vpop.permute.xlu0 %607
      %610 = vset.pattern.permute.xlu0 2
      %611 = vperm.xlu0 %610, %v158
      %v612 = vpop.permute.xlu0 %611
      %614 = vset.pattern.permute.xlu0 2
      %615 = vperm.xlu0 %614, %v159
      %v616 = vpop.permute.xlu0 %615
      %618 = vset.pattern.permute.xlu0 2
      %619 = vperm.xlu0 %618, %v160
      %v620 = vpop.permute.xlu0 %619
      %622 = vset.pattern.permute.xlu0 2
      %623 = vperm.xlu0 %622, %v161
      %v624 = vpop.permute.xlu0 %623
      %626 = vset.pattern.permute.xlu0 2
      %627 = vperm.xlu0 %626, %v162
      %v628 = vpop.permute.xlu0 %627
      %630 = vset.pattern.permute.xlu0 2
      %631 = vperm.xlu0 %630, %v163
      %v632 = vpop.permute.xlu0 %631
      %634 = vset.pattern.permute.xlu0 2
      %635 = vperm.xlu0 %634, %v164
      %v636 = vpop.permute.xlu0 %635
      %638 = vset.pattern.permute.xlu0 2
      %639 = vperm.xlu0 %638, %v165
      %v640 = vpop.permute.xlu0 %639
      %642 = vset.pattern.permute.xlu0 2
      %643 = vperm.xlu0 %642, %v166
      %v644 = vpop.permute.xlu0 %643
      %646 = vset.pattern.permute.xlu0 2
      %647 = vperm.xlu0 %646, %v167
      %v648 = vpop.permute.xlu0 %647
      %650 = vset.pattern.permute.xlu0 2
      %651 = vperm.xlu0 %650, %v168
      %v652 = vpop.permute.xlu0 %651
      %654 = vset.pattern.permute.xlu0 2
      %655 = vperm.xlu0 %654, %v169
      %v656 = vpop.permute.xlu0 %655
      %658 = vset.pattern.permute.xlu0 2
      %659 = vperm.xlu0 %658, %v170
      %v660 = vpop.permute.xlu0 %659
      %662 = vset.pattern.permute.xlu0 2
      %663 = vperm.xlu0 %662, %v171
      %v664 = vpop.permute.xlu0 %663
      %666 = vset.pattern.permute.xlu0 2
      %667 = vperm.xlu0 %666, %v172
      %v668 = vpop.permute.xlu0 %667
      %670 = vset.pattern.permute.xlu0 2
      %671 = vperm.xlu0 %670, %v173
      %v672 = vpop.permute.xlu0 %671
      %674 = vset.pattern.permute.xlu0 2
      %675 = vperm.xlu0 %674, %v174
      %v676 = vpop.permute.xlu0 %675
      %678 = vset.pattern.permute.xlu0 2
      %679 = vperm.xlu0 %678, %v175
      %v680 = vpop.permute.xlu0 %679
      %682 = vset.pattern.permute.xlu0 2
      %683 = vperm.xlu0 %682, %v176
      %v684 = vpop.permute.xlu0 %683
      %686 = vset.pattern.permute.xlu0 2
      %687 = vperm.xlu0 %686, %v177
      %v688 = vpop.permute.xlu0 %687
      %690 = vset.pattern.permute.xlu0 2
      %691 = vperm.xlu0 %690, %v178
      %v692 = vpop.permute.xlu0 %691
      %v694 = vperm.slane %v179, 2
      %v695 = vmul.f32 %v568, %v694
      %v696 = vmul.f32 %v572, %v694
      %v697 = vmul.f32 %v576, %v694
      %v698 = vmul.f32 %v580, %v694
      %v699 = vmul.f32 %v584, %v694
      %v700 = vmul.f32 %v588, %v694
      %v701 = vmul.f32 %v592, %v694
      %v702 = vmul.f32 %v596, %v694
      %v703 = vmul.f32 %v600, %v694
      %v704 = vmul.f32 %v604, %v694
      %v705 = vmul.f32 %v608, %v694
      %v706 = vmul.f32 %v612, %v694
      %v707 = vmul.f32 %v616, %v694
      %v708 = vmul.f32 %v620, %v694
      %v709 = vmul.f32 %v624, %v694
      %v710 = vmul.f32 %v628, %v694
      %v711 = vmul.f32 %v632, %v694
      %v712 = vmul.f32 %v636, %v694
      %v713 = vmul.f32 %v640, %v694
      %v714 = vmul.f32 %v644, %v694
      %v715 = vmul.f32 %v648, %v694
      %v716 = vmul.f32 %v652, %v694
      %v717 = vmul.f32 %v656, %v694
      %v718 = vmul.f32 %v660, %v694
      %v719 = vmul.f32 %v664, %v694
      %v720 = vmul.f32 %v668, %v694
      %v721 = vmul.f32 %v672, %v694
      %v722 = vmul.f32 %v676, %v694
      %v723 = vmul.f32 %v680, %v694
      %v724 = vmul.f32 %v684, %v694
      %v725 = vmul.f32 %v688, %v694
      %v726 = vmul.f32 %v692, %v694
      %v727 = vadd.f32 %v534, %v695
      %v728 = vadd.f32 %v535, %v696
      %v729 = vadd.f32 %v536, %v697
      %v730 = vadd.f32 %v537, %v698
      %v731 = vadd.f32 %v538, %v699
      %v732 = vadd.f32 %v539, %v700
      %v733 = vadd.f32 %v540, %v701
      %v734 = vadd.f32 %v541, %v702
      %v735 = vadd.f32 %v542, %v703
      %v736 = vadd.f32 %v543, %v704
      %v737 = vadd.f32 %v544, %v705
      %v738 = vadd.f32 %v545, %v706
      %v739 = vadd.f32 %v546, %v707
      %v740 = vadd.f32 %v547, %v708
      %v741 = vadd.f32 %v548, %v709
      %v742 = vadd.f32 %v549, %v710
      %v743 = vadd.f32 %v550, %v711
      %v744 = vadd.f32 %v551, %v712
      %v745 = vadd.f32 %v552, %v713
      %v746 = vadd.f32 %v553, %v714
      %v747 = vadd.f32 %v554, %v715
      %v748 = vadd.f32 %v555, %v716
      %v749 = vadd.f32 %v556, %v717
      %v750 = vadd.f32 %v557, %v718
      %v751 = vadd.f32 %v558, %v719
      %v752 = vadd.f32 %v559, %v720
      %v753 = vadd.f32 %v560, %v721
      %v754 = vadd.f32 %v561, %v722
      %v755 = vadd.f32 %v562, %v723
      %v756 = vadd.f32 %v563, %v724
      %v757 = vadd.f32 %v564, %v725
      %v758 = vadd.f32 %v565, %v726
      %759 = vset.pattern.permute.xlu0 3
      %760 = vperm.xlu0 %759, %v147
      %v761 = vpop.permute.xlu0 %760
      %763 = vset.pattern.permute.xlu0 3
      %764 = vperm.xlu0 %763, %v148
      %v765 = vpop.permute.xlu0 %764
      %767 = vset.pattern.permute.xlu0 3
      %768 = vperm.xlu0 %767, %v149
      %v769 = vpop.permute.xlu0 %768
      %771 = vset.pattern.permute.xlu0 3
      %772 = vperm.xlu0 %771, %v150
      %v773 = vpop.permute.xlu0 %772
      %775 = vset.pattern.permute.xlu0 3
      %776 = vperm.xlu0 %775, %v151
      %v777 = vpop.permute.xlu0 %776
      %779 = vset.pattern.permute.xlu0 3
      %780 = vperm.xlu0 %779, %v152
      %v781 = vpop.permute.xlu0 %780
      %783 = vset.pattern.permute.xlu0 3
      %784 = vperm.xlu0 %783, %v153
      %v785 = vpop.permute.xlu0 %784
      %787 = vset.pattern.permute.xlu0 3
      %788 = vperm.xlu0 %787, %v154
      %v789 = vpop.permute.xlu0 %788
      %791 = vset.pattern.permute.xlu0 3
      %792 = vperm.xlu0 %791, %v155
      %v793 = vpop.permute.xlu0 %792
      %795 = vset.pattern.permute.xlu0 3
      %796 = vperm.xlu0 %795, %v156
      %v797 = vpop.permute.xlu0 %796
      %799 = vset.pattern.permute.xlu0 3
      %800 = vperm.xlu0 %799, %v157
      %v801 = vpop.permute.xlu0 %800
      %803 = vset.pattern.permute.xlu0 3
      %804 = vperm.xlu0 %803, %v158
      %v805 = vpop.permute.xlu0 %804
      %807 = vset.pattern.permute.xlu0 3
      %808 = vperm.xlu0 %807, %v159
      %v809 = vpop.permute.xlu0 %808
      %811 = vset.pattern.permute.xlu0 3
      %812 = vperm.xlu0 %811, %v160
      %v813 = vpop.permute.xlu0 %812
      %815 = vset.pattern.permute.xlu0 3
      %816 = vperm.xlu0 %815, %v161
      %v817 = vpop.permute.xlu0 %816
      %819 = vset.pattern.permute.xlu0 3
      %820 = vperm.xlu0 %819, %v162
      %v821 = vpop.permute.xlu0 %820
      %823 = vset.pattern.permute.xlu0 3
      %824 = vperm.xlu0 %823, %v163
      %v825 = vpop.permute.xlu0 %824
      %827 = vset.pattern.permute.xlu0 3
      %828 = vperm.xlu0 %827, %v164
      %v829 = vpop.permute.xlu0 %828
      %831 = vset.pattern.permute.xlu0 3
      %832 = vperm.xlu0 %831, %v165
      %v833 = vpop.permute.xlu0 %832
      %835 = vset.pattern.permute.xlu0 3
      %836 = vperm.xlu0 %835, %v166
      %v837 = vpop.permute.xlu0 %836
      %839 = vset.pattern.permute.xlu0 3
      %840 = vperm.xlu0 %839, %v167
      %v841 = vpop.permute.xlu0 %840
      %843 = vset.pattern.permute.xlu0 3
      %844 = vperm.xlu0 %843, %v168
      %v845 = vpop.permute.xlu0 %844
      %847 = vset.pattern.permute.xlu0 3
      %848 = vperm.xlu0 %847, %v169
      %v849 = vpop.permute.xlu0 %848
      %851 = vset.pattern.permute.xlu0 3
      %852 = vperm.xlu0 %851, %v170
      %v853 = vpop.permute.xlu0 %852
      %855 = vset.pattern.permute.xlu0 3
      %856 = vperm.xlu0 %855, %v171
      %v857 = vpop.permute.xlu0 %856
      %859 = vset.pattern.permute.xlu0 3
      %860 = vperm.xlu0 %859, %v172
      %v861 = vpop.permute.xlu0 %860
      %863 = vset.pattern.permute.xlu0 3
      %864 = vperm.xlu0 %863, %v173
      %v865 = vpop.permute.xlu0 %864
      %867 = vset.pattern.permute.xlu0 3
      %868 = vperm.xlu0 %867, %v174
      %v869 = vpop.permute.xlu0 %868
      %871 = vset.pattern.permute.xlu0 3
      %872 = vperm.xlu0 %871, %v175
      %v873 = vpop.permute.xlu0 %872
      %875 = vset.pattern.permute.xlu0 3
      %876 = vperm.xlu0 %875, %v176
      %v877 = vpop.permute.xlu0 %876
      %879 = vset.pattern.permute.xlu0 3
      %880 = vperm.xlu0 %879, %v177
      %v881 = vpop.permute.xlu0 %880
      %883 = vset.pattern.permute.xlu0 3
      %884 = vperm.xlu0 %883, %v178
      %v885 = vpop.permute.xlu0 %884
      %v887 = vperm.slane %v179, 3
      %v888 = vmul.f32 %v761, %v887
      %v889 = vmul.f32 %v765, %v887
      %v890 = vmul.f32 %v769, %v887
      %v891 = vmul.f32 %v773, %v887
      %v892 = vmul.f32 %v777, %v887
      %v893 = vmul.f32 %v781, %v887
      %v894 = vmul.f32 %v785, %v887
      %v895 = vmul.f32 %v789, %v887
      %v896 = vmul.f32 %v793, %v887
      %v897 = vmul.f32 %v797, %v887
      %v898 = vmul.f32 %v801, %v887
      %v899 = vmul.f32 %v805, %v887
      %v900 = vmul.f32 %v809, %v887
      %v901 = vmul.f32 %v813, %v887
      %v902 = vmul.f32 %v817, %v887
      %v903 = vmul.f32 %v821, %v887
      %v904 = vmul.f32 %v825, %v887
      %v905 = vmul.f32 %v829, %v887
      %v906 = vmul.f32 %v833, %v887
      %v907 = vmul.f32 %v837, %v887
      %v908 = vmul.f32 %v841, %v887
      %v909 = vmul.f32 %v845, %v887
      %v910 = vmul.f32 %v849, %v887
      %v911 = vmul.f32 %v853, %v887
      %v912 = vmul.f32 %v857, %v887
      %v913 = vmul.f32 %v861, %v887
      %v914 = vmul.f32 %v865, %v887
      %v915 = vmul.f32 %v869, %v887
      %v916 = vmul.f32 %v873, %v887
      %v917 = vmul.f32 %v877, %v887
      %v918 = vmul.f32 %v881, %v887
      %v919 = vmul.f32 %v885, %v887
      %v920 = vadd.f32 %v727, %v888
      %v921 = vadd.f32 %v728, %v889
      %v922 = vadd.f32 %v729, %v890
      %v923 = vadd.f32 %v730, %v891
      %v924 = vadd.f32 %v731, %v892
      %v925 = vadd.f32 %v732, %v893
      %v926 = vadd.f32 %v733, %v894
      %v927 = vadd.f32 %v734, %v895
      %v928 = vadd.f32 %v735, %v896
      %v929 = vadd.f32 %v736, %v897
      %v930 = vadd.f32 %v737, %v898
      %v931 = vadd.f32 %v738, %v899
      %v932 = vadd.f32 %v739, %v900
      %v933 = vadd.f32 %v740, %v901
      %v934 = vadd.f32 %v741, %v902
      %v935 = vadd.f32 %v742, %v903
      %v936 = vadd.f32 %v743, %v904
      %v937 = vadd.f32 %v744, %v905
      %v938 = vadd.f32 %v745, %v906
      %v939 = vadd.f32 %v746, %v907
      %v940 = vadd.f32 %v747, %v908
      %v941 = vadd.f32 %v748, %v909
      %v942 = vadd.f32 %v749, %v910
      %v943 = vadd.f32 %v750, %v911
      %v944 = vadd.f32 %v751, %v912
      %v945 = vadd.f32 %v752, %v913
      %v946 = vadd.f32 %v753, %v914
      %v947 = vadd.f32 %v754, %v915
      %v948 = vadd.f32 %v755, %v916
      %v949 = vadd.f32 %v756, %v917
      %v950 = vadd.f32 %v757, %v918
      %v951 = vadd.f32 %v758, %v919
      %v952 = vperm.slane %v179, 4
      %v953 = vadd.f32 %v920, %v952
      %v954 = vadd.f32 %v921, %v952
      %v955 = vadd.f32 %v922, %v952
      %v956 = vadd.f32 %v923, %v952
      %v957 = vadd.f32 %v924, %v952
      %v958 = vadd.f32 %v925, %v952
      %v959 = vadd.f32 %v926, %v952
      %v960 = vadd.f32 %v927, %v952
      %v961 = vadd.f32 %v928, %v952
      %v962 = vadd.f32 %v929, %v952
      %v963 = vadd.f32 %v930, %v952
      %v964 = vadd.f32 %v931, %v952
      %v965 = vadd.f32 %v932, %v952
      %v966 = vadd.f32 %v933, %v952
      %v967 = vadd.f32 %v934, %v952
      %v968 = vadd.f32 %v935, %v952
      %v969 = vadd.f32 %v936, %v952
      %v970 = vadd.f32 %v937, %v952
      %v971 = vadd.f32 %v938, %v952
      %v972 = vadd.f32 %v939, %v952
      %v973 = vadd.f32 %v940, %v952
      %v974 = vadd.f32 %v941, %v952
      %v975 = vadd.f32 %v942, %v952
      %v976 = vadd.f32 %v943, %v952
      %v977 = vadd.f32 %v944, %v952
      %v978 = vadd.f32 %v945, %v952
      %v979 = vadd.f32 %v946, %v952
      %v980 = vadd.f32 %v947, %v952
      %v981 = vadd.f32 %v948, %v952
      %v982 = vadd.f32 %v949, %v952
      %v983 = vadd.f32 %v950, %v952
      %v984 = vadd.f32 %v951, %v952
      %v985 = vmax.f32 %v953, 0.0
      %v986 = vmax.f32 %v954, 0.0
      %v987 = vmax.f32 %v955, 0.0
      %v988 = vmax.f32 %v956, 0.0
      %v989 = vmax.f32 %v957, 0.0
      %v990 = vmax.f32 %v958, 0.0
      %v991 = vmax.f32 %v959, 0.0
      %v992 = vmax.f32 %v960, 0.0
      %v993 = vmax.f32 %v961, 0.0
      %v994 = vmax.f32 %v962, 0.0
      %v995 = vmax.f32 %v963, 0.0
      %v996 = vmax.f32 %v964, 0.0
      %v997 = vmax.f32 %v965, 0.0
      %v998 = vmax.f32 %v966, 0.0
      %v999 = vmax.f32 %v967, 0.0
      %v1000 = vmax.f32 %v968, 0.0
      %v1001 = vmax.f32 %v969, 0.0
      %v1002 = vmax.f32 %v970, 0.0
      %v1003 = vmax.f32 %v971, 0.0
      %v1004 = vmax.f32 %v972, 0.0
      %v1005 = vmax.f32 %v973, 0.0
      %v1006 = vmax.f32 %v974, 0.0
      %v1007 = vmax.f32 %v975, 0.0
      %v1008 = vmax.f32 %v976, 0.0
      %v1009 = vmax.f32 %v977, 0.0
      %v1010 = vmax.f32 %v978, 0.0
      %v1011 = vmax.f32 %v979, 0.0
      %v1012 = vmax.f32 %v980, 0.0
      %v1013 = vmax.f32 %v981, 0.0
      %v1014 = vmax.f32 %v982, 0.0
      %v1015 = vmax.f32 %v983, 0.0
      %v1016 = vmax.f32 %v984, 0.0
      %v1017 = vld [vmem:[%s1 + $0x8] sm:$0xff]
      %v1018 = vld [vmem:[%s1 + $0x10] sm:$0xff]
      %v1019 = vld [vmem:[%s1 + $0x18] sm:$0xff]
      %v1020 = vld [vmem:[%s1 + $0x20] sm:$0xff]
      %v1021 = vld [vmem:[%s1 + $0x28] sm:$0xff]
      %v1022 = vld [vmem:[%s1 + $0x30] sm:$0xff]
      %v1023 = vld [vmem:[%s1 + $0x38] sm:$0xff]
      %v1024 = vld [vmem:[%s1 + $0x40] sm:$0xff]
      %vm1025 = vcmask 523264
      %v1027 = vsel %vm1025, %v985, 0
      %v1030 = vsel %vm1025, %v986, 0
      %v1033 = vsel %vm1025, %v987, 0
      %v1036 = vsel %vm1025, %v988, 0
      %v1039 = vsel %vm1025, %v989, 0
      %v1042 = vsel %vm1025, %v990, 0
      %v1045 = vsel %vm1025, %v991, 0
      %v1048 = vsel %vm1025, %v992, 0
      %v1051 = vsel %vm1025, %v993, 0
      %v1054 = vsel %vm1025, %v994, 0
      %v1057 = vsel %vm1025, %v995, 0
      %v1060 = vsel %vm1025, %v996, 0
      %v1063 = vsel %vm1025, %v997, 0
      %v1066 = vsel %vm1025, %v998, 0
      %v1069 = vsel %vm1025, %v999, 0
      %v1072 = vsel %vm1025, %v1000, 0
      %v1075 = vsel %vm1025, %v1001, 0
      %v1078 = vsel %vm1025, %v1002, 0
      %v1081 = vsel %vm1025, %v1003, 0
      %v1084 = vsel %vm1025, %v1004, 0
      %v1087 = vsel %vm1025, %v1005, 0
      %v1090 = vsel %vm1025, %v1006, 0
      %v1093 = vsel %vm1025, %v1007, 0
      %v1096 = vsel %vm1025, %v1008, 0
      %v1099 = vsel %vm1025, %v1009, 0
      %v1102 = vsel %vm1025, %v1010, 0
      %v1105 = vsel %vm1025, %v1011, 0
      %v1108 = vsel %vm1025, %v1012, 0
      %v1111 = vsel %vm1025, %v1013, 0
      %v1114 = vsel %vm1025, %v1014, 0
      %v1117 = vsel %vm1025, %v1015, 0
      %v1120 = vsel %vm1025, %v1016, 0
      %1122 = vmatpush.msra.mxu0 0.0
      %1123 = vmatpush.msra.mxu0 0.0
      %1124 = vmatpush.msra.mxu0 0.0
      %1125 = vmatpush.msra.mxu0 0.0
      %1126 = vmatpush.msra.mxu0 0.0
      %1127 = vmatpush.msra.mxu0 0.0
      %1128 = vmatpush.msra.mxu0 0.0
      %1129 = vmatpush.msra.mxu0 0.0
      %1130 = vmatpush.msra.mxu0 %v1024
      %1131 = vmatpush.msra.mxu0 %v1023
      %1132 = vmatpush.msra.mxu0 %v1022
      %1133 = vmatpush.msra.mxu0 %v1021
      %1134 = vmatpush.msra.mxu0 %v1020
      %1135 = vmatpush.msra.mxu0 %v1019
      %1136 = vmatpush.msra.mxu0 %v1018
      %1137 = vmatpush.msra.mxu0 %v1017
      %1138 = vmatmul.f32.gmra.mxu0 %v1027
      %v1139 = vpop.f32.mrf.mxu0
      %v1140 = vadd.f32 0.0, %v1139
      %1141 = vmatmul.f32.gmra.mxu0 %v1030
      %v1142 = vpop.f32.mrf.mxu0
      %v1143 = vadd.f32 0.0, %v1142
      %1144 = vmatmul.f32.gmra.mxu0 %v1033
      %v1145 = vpop.f32.mrf.mxu0
      %v1146 = vadd.f32 0.0, %v1145
      %1147 = vmatmul.f32.gmra.mxu0 %v1036
      %v1148 = vpop.f32.mrf.mxu0
      %v1149 = vadd.f32 0.0, %v1148
      %1150 = vmatmul.f32.gmra.mxu0 %v1039
      %v1151 = vpop.f32.mrf.mxu0
      %v1152 = vadd.f32 0.0, %v1151
      %1153 = vmatmul.f32.gmra.mxu0 %v1042
      %v1154 = vpop.f32.mrf.mxu0
      %v1155 = vadd.f32 0.0, %v1154
      %1156 = vmatmul.f32.gmra.mxu0 %v1045
      %v1157 = vpop.f32.mrf.mxu0
      %v1158 = vadd.f32 0.0, %v1157
      %1159 = vmatmul.f32.gmra.mxu0 %v1048
      %v1160 = vpop.f32.mrf.mxu0
      %v1161 = vadd.f32 0.0, %v1160
      %1162 = vmatmul.f32.gmra.mxu0 %v1051
      %v1163 = vpop.f32.mrf.mxu0
      %v1164 = vadd.f32 0.0, %v1163
      %1165 = vmatmul.f32.gmra.mxu0 %v1054
      %v1166 = vpop.f32.mrf.mxu0
      %v1167 = vadd.f32 0.0, %v1166
      %1168 = vmatmul.f32.gmra.mxu0 %v1057
      %v1169 = vpop.f32.mrf.mxu0
      %v1170 = vadd.f32 0.0, %v1169
      %1171 = vmatmul.f32.gmra.mxu0 %v1060
      %v1172 = vpop.f32.mrf.mxu0
      %v1173 = vadd.f32 0.0, %v1172
      %1174 = vmatmul.f32.gmra.mxu0 %v1063
      %v1175 = vpop.f32.mrf.mxu0
      %v1176 = vadd.f32 0.0, %v1175
      %1177 = vmatmul.f32.gmra.mxu0 %v1066
      %v1178 = vpop.f32.mrf.mxu0
      %v1179 = vadd.f32 0.0, %v1178
      %1180 = vmatmul.f32.gmra.mxu0 %v1069
      %v1181 = vpop.f32.mrf.mxu0
      %v1182 = vadd.f32 0.0, %v1181
      %1183 = vmatmul.f32.gmra.mxu0 %v1072
      %v1184 = vpop.f32.mrf.mxu0
      %v1185 = vadd.f32 0.0, %v1184
      %1186 = vmatmul.f32.gmra.mxu0 %v1075
      %v1187 = vpop.f32.mrf.mxu0
      %v1188 = vadd.f32 0.0, %v1187
      %1189 = vmatmul.f32.gmra.mxu0 %v1078
      %v1190 = vpop.f32.mrf.mxu0
      %v1191 = vadd.f32 0.0, %v1190
      %1192 = vmatmul.f32.gmra.mxu0 %v1081
      %v1193 = vpop.f32.mrf.mxu0
      %v1194 = vadd.f32 0.0, %v1193
      %1195 = vmatmul.f32.gmra.mxu0 %v1084
      %v1196 = vpop.f32.mrf.mxu0
      %v1197 = vadd.f32 0.0, %v1196
      %1198 = vmatmul.f32.gmra.mxu0 %v1087
      %v1199 = vpop.f32.mrf.mxu0
      %v1200 = vadd.f32 0.0, %v1199
      %1201 = vmatmul.f32.gmra.mxu0 %v1090
      %v1202 = vpop.f32.mrf.mxu0
      %v1203 = vadd.f32 0.0, %v1202
      %1204 = vmatmul.f32.gmra.mxu0 %v1093
      %v1205 = vpop.f32.mrf.mxu0
      %v1206 = vadd.f32 0.0, %v1205
      %1207 = vmatmul.f32.gmra.mxu0 %v1096
      %v1208 = vpop.f32.mrf.mxu0
      %v1209 = vadd.f32 0.0, %v1208
      %1210 = vmatmul.f32.gmra.mxu0 %v1099
      %v1211 = vpop.f32.mrf.mxu0
      %v1212 = vadd.f32 0.0, %v1211
      %1213 = vmatmul.f32.gmra.mxu0 %v1102
      %v1214 = vpop.f32.mrf.mxu0
      %v1215 = vadd.f32 0.0, %v1214
      %1216 = vmatmul.f32.gmra.mxu0 %v1105
      %v1217 = vpop.f32.mrf.mxu0
      %v1218 = vadd.f32 0.0, %v1217
      %1219 = vmatmul.f32.gmra.mxu0 %v1108
      %v1220 = vpop.f32.mrf.mxu0
      %v1221 = vadd.f32 0.0, %v1220
      %1222 = vmatmul.f32.gmra.mxu0 %v1111
      %v1223 = vpop.f32.mrf.mxu0
      %v1224 = vadd.f32 0.0, %v1223
      %1225 = vmatmul.f32.gmra.mxu0 %v1114
      %v1226 = vpop.f32.mrf.mxu0
      %v1227 = vadd.f32 0.0, %v1226
      %1228 = vmatmul.f32.gmra.mxu0 %v1117
      %v1229 = vpop.f32.mrf.mxu0
      %v1230 = vadd.f32 0.0, %v1229
      %1231 = vmatmul.f32.gmra.mxu0 %v1120
      %v1232 = vpop.f32.mrf.mxu0
      %v1233 = vadd.f32 0.0, %v1232
      %1234 = vdwg.mxu0
      %v1235 = vld [vmem:[%s1 + $0x48] sm:$0x1]
      %v1236 = vperm.slane %v1235, 0
      %v1237 = vadd.f32 %v1140, %v1236
      %v1238 = vadd.f32 %v1143, %v1236
      %v1239 = vadd.f32 %v1146, %v1236
      %v1240 = vadd.f32 %v1149, %v1236
      %v1241 = vadd.f32 %v1152, %v1236
      %v1242 = vadd.f32 %v1155, %v1236
      %v1243 = vadd.f32 %v1158, %v1236
      %v1244 = vadd.f32 %v1161, %v1236
      %v1245 = vadd.f32 %v1164, %v1236
      %v1246 = vadd.f32 %v1167, %v1236
      %v1247 = vadd.f32 %v1170, %v1236
      %v1248 = vadd.f32 %v1173, %v1236
      %v1249 = vadd.f32 %v1176, %v1236
      %v1250 = vadd.f32 %v1179, %v1236
      %v1251 = vadd.f32 %v1182, %v1236
      %v1252 = vadd.f32 %v1185, %v1236
      %v1253 = vadd.f32 %v1188, %v1236
      %v1254 = vadd.f32 %v1191, %v1236
      %v1255 = vadd.f32 %v1194, %v1236
      %v1256 = vadd.f32 %v1197, %v1236
      %v1257 = vadd.f32 %v1200, %v1236
      %v1258 = vadd.f32 %v1203, %v1236
      %v1259 = vadd.f32 %v1206, %v1236
      %v1260 = vadd.f32 %v1209, %v1236
      %v1261 = vadd.f32 %v1212, %v1236
      %v1262 = vadd.f32 %v1215, %v1236
      %v1263 = vadd.f32 %v1218, %v1236
      %v1264 = vadd.f32 %v1221, %v1236
      %v1265 = vadd.f32 %v1224, %v1236
      %v1266 = vadd.f32 %v1227, %v1236
      %v1267 = vadd.f32 %v1230, %v1236
      %v1268 = vadd.f32 %v1233, %v1236
      %1301 = vrot.lane.b32.xlu0 %v1237, 127
      %v1302 = vpop.permute.xlu0 %1301
      %1303 = vrot.lane.b32.xlu0 %v1238, 127
      %v1304 = vpop.permute.xlu0 %1303
      %1305 = vrot.lane.b32.xlu0 %v1239, 127
      %v1306 = vpop.permute.xlu0 %1305
      %1307 = vrot.lane.b32.xlu0 %v1240, 127
      %v1308 = vpop.permute.xlu0 %1307
      %1309 = vrot.lane.b32.xlu0 %v1241, 127
      %v1310 = vpop.permute.xlu0 %1309
      %1311 = vrot.lane.b32.xlu0 %v1242, 127
      %v1312 = vpop.permute.xlu0 %1311
      %1313 = vrot.lane.b32.xlu0 %v1243, 127
      %v1314 = vpop.permute.xlu0 %1313
      %1315 = vrot.lane.b32.xlu0 %v1244, 127
      %v1316 = vpop.permute.xlu0 %1315
      %1317 = vrot.lane.b32.xlu0 %v1245, 127
      %v1318 = vpop.permute.xlu0 %1317
      %1319 = vrot.lane.b32.xlu0 %v1246, 127
      %v1320 = vpop.permute.xlu0 %1319
      %1321 = vrot.lane.b32.xlu0 %v1247, 127
      %v1322 = vpop.permute.xlu0 %1321
      %1323 = vrot.lane.b32.xlu0 %v1248, 127
      %v1324 = vpop.permute.xlu0 %1323
      %1325 = vrot.lane.b32.xlu0 %v1249, 127
      %v1326 = vpop.permute.xlu0 %1325
      %1327 = vrot.lane.b32.xlu0 %v1250, 127
      %v1328 = vpop.permute.xlu0 %1327
      %1329 = vrot.lane.b32.xlu0 %v1251, 127
      %v1330 = vpop.permute.xlu0 %1329
      %1331 = vrot.lane.b32.xlu0 %v1252, 127
      %v1332 = vpop.permute.xlu0 %1331
      %1333 = vrot.lane.b32.xlu0 %v1253, 127
      %v1334 = vpop.permute.xlu0 %1333
      %1335 = vrot.lane.b32.xlu0 %v1254, 127
      %v1336 = vpop.permute.xlu0 %1335
      %1337 = vrot.lane.b32.xlu0 %v1255, 127
      %v1338 = vpop.permute.xlu0 %1337
      %1339 = vrot.lane.b32.xlu0 %v1256, 127
      %v1340 = vpop.permute.xlu0 %1339
      %1341 = vrot.lane.b32.xlu0 %v1257, 127
      %v1342 = vpop.permute.xlu0 %1341
      %1343 = vrot.lane.b32.xlu0 %v1258, 127
      %v1344 = vpop.permute.xlu0 %1343
      %1345 = vrot.lane.b32.xlu0 %v1259, 127
      %v1346 = vpop.permute.xlu0 %1345
      %1347 = vrot.lane.b32.xlu0 %v1260, 127
      %v1348 = vpop.permute.xlu0 %1347
      %1349 = vrot.lane.b32.xlu0 %v1261, 127
      %v1350 = vpop.permute.xlu0 %1349
      %1351 = vrot.lane.b32.xlu0 %v1262, 127
      %v1352 = vpop.permute.xlu0 %1351
      %1353 = vrot.lane.b32.xlu0 %v1263, 127
      %v1354 = vpop.permute.xlu0 %1353
      %1355 = vrot.lane.b32.xlu0 %v1264, 127
      %v1356 = vpop.permute.xlu0 %1355
      %1357 = vrot.lane.b32.xlu0 %v1265, 127
      %v1358 = vpop.permute.xlu0 %1357
      %1359 = vrot.lane.b32.xlu0 %v1266, 127
      %v1360 = vpop.permute.xlu0 %1359
      %1361 = vrot.lane.b32.xlu0 %v1267, 127
      %v1362 = vpop.permute.xlu0 %1361
      %1363 = vrot.lane.b32.xlu0 %v1268, 127
      %v1364 = vpop.permute.xlu0 %1363
      %v1397 = vmax.f32 %v1237, %v1302
      %v1398 = vmax.f32 %v1238, %v1304
      %v1399 = vmax.f32 %v1239, %v1306
      %v1400 = vmax.f32 %v1240, %v1308
      %v1401 = vmax.f32 %v1241, %v1310
      %v1402 = vmax.f32 %v1242, %v1312
      %v1403 = vmax.f32 %v1243, %v1314
      %v1404 = vmax.f32 %v1244, %v1316
      %v1405 = vmax.f32 %v1245, %v1318
      %v1406 = vmax.f32 %v1246, %v1320
      %v1407 = vmax.f32 %v1247, %v1322
      %v1408 = vmax.f32 %v1248, %v1324
      %v1409 = vmax.f32 %v1249, %v1326
      %v1410 = vmax.f32 %v1250, %v1328
      %v1411 = vmax.f32 %v1251, %v1330
      %v1412 = vmax.f32 %v1252, %v1332
      %v1413 = vmax.f32 %v1253, %v1334
      %v1414 = vmax.f32 %v1254, %v1336
      %v1415 = vmax.f32 %v1255, %v1338
      %v1416 = vmax.f32 %v1256, %v1340
      %v1417 = vmax.f32 %v1257, %v1342
      %v1418 = vmax.f32 %v1258, %v1344
      %v1419 = vmax.f32 %v1259, %v1346
      %v1420 = vmax.f32 %v1260, %v1348
      %v1421 = vmax.f32 %v1261, %v1350
      %v1422 = vmax.f32 %v1262, %v1352
      %v1423 = vmax.f32 %v1263, %v1354
      %v1424 = vmax.f32 %v1264, %v1356
      %v1425 = vmax.f32 %v1265, %v1358
      %v1426 = vmax.f32 %v1266, %v1360
      %v1427 = vmax.f32 %v1267, %v1362
      %v1428 = vmax.f32 %v1268, %v1364
      %1430 = vset.pattern.permute.xlu0 0
      %1431 = vperm.xlu0 %1430, %v1397
      %v1432 = vpop.permute.xlu0 %1431
      %1435 = vset.pattern.permute.xlu0 0
      %1436 = vperm.xlu0 %1435, %v1398
      %v1437 = vpop.permute.xlu0 %1436
      %1440 = vset.pattern.permute.xlu0 0
      %1441 = vperm.xlu0 %1440, %v1399
      %v1442 = vpop.permute.xlu0 %1441
      %1445 = vset.pattern.permute.xlu0 0
      %1446 = vperm.xlu0 %1445, %v1400
      %v1447 = vpop.permute.xlu0 %1446
      %1450 = vset.pattern.permute.xlu0 0
      %1451 = vperm.xlu0 %1450, %v1401
      %v1452 = vpop.permute.xlu0 %1451
      %1455 = vset.pattern.permute.xlu0 0
      %1456 = vperm.xlu0 %1455, %v1402
      %v1457 = vpop.permute.xlu0 %1456
      %1460 = vset.pattern.permute.xlu0 0
      %1461 = vperm.xlu0 %1460, %v1403
      %v1462 = vpop.permute.xlu0 %1461
      %1465 = vset.pattern.permute.xlu0 0
      %1466 = vperm.xlu0 %1465, %v1404
      %v1467 = vpop.permute.xlu0 %1466
      %1470 = vset.pattern.permute.xlu0 0
      %1471 = vperm.xlu0 %1470, %v1405
      %v1472 = vpop.permute.xlu0 %1471
      %1475 = vset.pattern.permute.xlu0 0
      %1476 = vperm.xlu0 %1475, %v1406
      %v1477 = vpop.permute.xlu0 %1476
      %1480 = vset.pattern.permute.xlu0 0
      %1481 = vperm.xlu0 %1480, %v1407
      %v1482 = vpop.permute.xlu0 %1481
      %1485 = vset.pattern.permute.xlu0 0
      %1486 = vperm.xlu0 %1485, %v1408
      %v1487 = vpop.permute.xlu0 %1486
      %1490 = vset.pattern.permute.xlu0 0
      %1491 = vperm.xlu0 %1490, %v1409
      %v1492 = vpop.permute.xlu0 %1491
      %1495 = vset.pattern.permute.xlu0 0
      %1496 = vperm.xlu0 %1495, %v1410
      %v1497 = vpop.permute.xlu0 %1496
      %1500 = vset.pattern.permute.xlu0 0
      %1501 = vperm.xlu0 %1500, %v1411
      %v1502 = vpop.permute.xlu0 %1501
      %1505 = vset.pattern.permute.xlu0 0
      %1506 = vperm.xlu0 %1505, %v1412
      %v1507 = vpop.permute.xlu0 %1506
      %1510 = vset.pattern.permute.xlu0 0
      %1511 = vperm.xlu0 %1510, %v1413
      %v1512 = vpop.permute.xlu0 %1511
      %1515 = vset.pattern.permute.xlu0 0
      %1516 = vperm.xlu0 %1515, %v1414
      %v1517 = vpop.permute.xlu0 %1516
      %1520 = vset.pattern.permute.xlu0 0
      %1521 = vperm.xlu0 %1520, %v1415
      %v1522 = vpop.permute.xlu0 %1521
      %1525 = vset.pattern.permute.xlu0 0
      %1526 = vperm.xlu0 %1525, %v1416
      %v1527 = vpop.permute.xlu0 %1526
      %1530 = vset.pattern.permute.xlu0 0
      %1531 = vperm.xlu0 %1530, %v1417
      %v1532 = vpop.permute.xlu0 %1531
      %1535 = vset.pattern.permute.xlu0 0
      %1536 = vperm.xlu0 %1535, %v1418
      %v1537 = vpop.permute.xlu0 %1536
      %1540 = vset.pattern.permute.xlu0 0
      %1541 = vperm.xlu0 %1540, %v1419
      %v1542 = vpop.permute.xlu0 %1541
      %1545 = vset.pattern.permute.xlu0 0
      %1546 = vperm.xlu0 %1545, %v1420
      %v1547 = vpop.permute.xlu0 %1546
      %1550 = vset.pattern.permute.xlu0 0
      %1551 = vperm.xlu0 %1550, %v1421
      %v1552 = vpop.permute.xlu0 %1551
      %1555 = vset.pattern.permute.xlu0 0
      %1556 = vperm.xlu0 %1555, %v1422
      %v1557 = vpop.permute.xlu0 %1556
      %1560 = vset.pattern.permute.xlu0 0
      %1561 = vperm.xlu0 %1560, %v1423
      %v1562 = vpop.permute.xlu0 %1561
      %1565 = vset.pattern.permute.xlu0 0
      %1566 = vperm.xlu0 %1565, %v1424
      %v1567 = vpop.permute.xlu0 %1566
      %1570 = vset.pattern.permute.xlu0 0
      %1571 = vperm.xlu0 %1570, %v1425
      %v1572 = vpop.permute.xlu0 %1571
      %1575 = vset.pattern.permute.xlu0 0
      %1576 = vperm.xlu0 %1575, %v1426
      %v1577 = vpop.permute.xlu0 %1576
      %1580 = vset.pattern.permute.xlu0 0
      %1581 = vperm.xlu0 %1580, %v1427
      %v1582 = vpop.permute.xlu0 %1581
      %1585 = vset.pattern.permute.xlu0 0
      %1586 = vperm.xlu0 %1585, %v1428
      %v1587 = vpop.permute.xlu0 %1586
      %v1589 = vsub.f32 %v1237, %v1432
      %v1590 = vsub.f32 %v1238, %v1437
      %v1591 = vsub.f32 %v1239, %v1442
      %v1592 = vsub.f32 %v1240, %v1447
      %v1593 = vsub.f32 %v1241, %v1452
      %v1594 = vsub.f32 %v1242, %v1457
      %v1595 = vsub.f32 %v1243, %v1462
      %v1596 = vsub.f32 %v1244, %v1467
      %v1597 = vsub.f32 %v1245, %v1472
      %v1598 = vsub.f32 %v1246, %v1477
      %v1599 = vsub.f32 %v1247, %v1482
      %v1600 = vsub.f32 %v1248, %v1487
      %v1601 = vsub.f32 %v1249, %v1492
      %v1602 = vsub.f32 %v1250, %v1497
      %v1603 = vsub.f32 %v1251, %v1502
      %v1604 = vsub.f32 %v1252, %v1507
      %v1605 = vsub.f32 %v1253, %v1512
      %v1606 = vsub.f32 %v1254, %v1517
      %v1607 = vsub.f32 %v1255, %v1522
      %v1608 = vsub.f32 %v1256, %v1527
      %v1609 = vsub.f32 %v1257, %v1532
      %v1610 = vsub.f32 %v1258, %v1537
      %v1611 = vsub.f32 %v1259, %v1542
      %v1612 = vsub.f32 %v1260, %v1547
      %v1613 = vsub.f32 %v1261, %v1552
      %v1614 = vsub.f32 %v1262, %v1557
      %v1615 = vsub.f32 %v1263, %v1562
      %v1616 = vsub.f32 %v1264, %v1567
      %v1617 = vsub.f32 %v1265, %v1572
      %v1618 = vsub.f32 %v1266, %v1577
      %v1619 = vsub.f32 %v1267, %v1582
      %v1620 = vsub.f32 %v1268, %v1587
      %v1621 = vmul.f32 %v1589, 1.442695
      %v1622 = vpow.pop %v1621
      %v1623 = vmul.f32 %v1590, 1.442695
      %v1624 = vpow.pop %v1623
      %v1625 = vmul.f32 %v1591, 1.442695
      %v1626 = vpow.pop %v1625
      %v1627 = vmul.f32 %v1592, 1.442695
      %v1628 = vpow.pop %v1627
      %v1629 = vmul.f32 %v1593, 1.442695
      %v1630 = vpow.pop %v1629
      %v1631 = vmul.f32 %v1594, 1.442695
      %v1632 = vpow.pop %v1631
      %v1633 = vmul.f32 %v1595, 1.442695
      %v1634 = vpow.pop %v1633
      %v1635 = vmul.f32 %v1596, 1.442695
      %v1636 = vpow.pop %v1635
      %v1637 = vmul.f32 %v1597, 1.442695
      %v1638 = vpow.pop %v1637
      %v1639 = vmul.f32 %v1598, 1.442695
      %v1640 = vpow.pop %v1639
      %v1641 = vmul.f32 %v1599, 1.442695
      %v1642 = vpow.pop %v1641
      %v1643 = vmul.f32 %v1600, 1.442695
      %v1644 = vpow.pop %v1643
      %v1645 = vmul.f32 %v1601, 1.442695
      %v1646 = vpow.pop %v1645
      %v1647 = vmul.f32 %v1602, 1.442695
      %v1648 = vpow.pop %v1647
      %v1649 = vmul.f32 %v1603, 1.442695
      %v1650 = vpow.pop %v1649
      %v1651 = vmul.f32 %v1604, 1.442695
      %v1652 = vpow.pop %v1651
      %v1653 = vmul.f32 %v1605, 1.442695
      %v1654 = vpow.pop %v1653
      %v1655 = vmul.f32 %v1606, 1.442695
      %v1656 = vpow.pop %v1655
      %v1657 = vmul.f32 %v1607, 1.442695
      %v1658 = vpow.pop %v1657
      %v1659 = vmul.f32 %v1608, 1.442695
      %v1660 = vpow.pop %v1659
      %v1661 = vmul.f32 %v1609, 1.442695
      %v1662 = vpow.pop %v1661
      %v1663 = vmul.f32 %v1610, 1.442695
      %v1664 = vpow.pop %v1663
      %v1665 = vmul.f32 %v1611, 1.442695
      %v1666 = vpow.pop %v1665
      %v1667 = vmul.f32 %v1612, 1.442695
      %v1668 = vpow.pop %v1667
      %v1669 = vmul.f32 %v1613, 1.442695
      %v1670 = vpow.pop %v1669
      %v1671 = vmul.f32 %v1614, 1.442695
      %v1672 = vpow.pop %v1671
      %v1673 = vmul.f32 %v1615, 1.442695
      %v1674 = vpow.pop %v1673
      %v1675 = vmul.f32 %v1616, 1.442695
      %v1676 = vpow.pop %v1675
      %v1677 = vmul.f32 %v1617, 1.442695
      %v1678 = vpow.pop %v1677
      %v1679 = vmul.f32 %v1618, 1.442695
      %v1680 = vpow.pop %v1679
      %v1681 = vmul.f32 %v1619, 1.442695
      %v1682 = vpow.pop %v1681
      %v1683 = vmul.f32 %v1620, 1.442695
      %v1684 = vpow.pop %v1683
      %1717 = vrot.lane.b32.xlu0 %v1622, 127
      %v1718 = vpop.permute.xlu0 %1717
      %1719 = vrot.lane.b32.xlu0 %v1624, 127
      %v1720 = vpop.permute.xlu0 %1719
      %1721 = vrot.lane.b32.xlu0 %v1626, 127
      %v1722 = vpop.permute.xlu0 %1721
      %1723 = vrot.lane.b32.xlu0 %v1628, 127
      %v1724 = vpop.permute.xlu0 %1723
      %1725 = vrot.lane.b32.xlu0 %v1630, 127
      %v1726 = vpop.permute.xlu0 %1725
      %1727 = vrot.lane.b32.xlu0 %v1632, 127
      %v1728 = vpop.permute.xlu0 %1727
      %1729 = vrot.lane.b32.xlu0 %v1634, 127
      %v1730 = vpop.permute.xlu0 %1729
      %1731 = vrot.lane.b32.xlu0 %v1636, 127
      %v1732 = vpop.permute.xlu0 %1731
      %1733 = vrot.lane.b32.xlu0 %v1638, 127
      %v1734 = vpop.permute.xlu0 %1733
      %1735 = vrot.lane.b32.xlu0 %v1640, 127
      %v1736 = vpop.permute.xlu0 %1735
      %1737 = vrot.lane.b32.xlu0 %v1642, 127
      %v1738 = vpop.permute.xlu0 %1737
      %1739 = vrot.lane.b32.xlu0 %v1644, 127
      %v1740 = vpop.permute.xlu0 %1739
      %1741 = vrot.lane.b32.xlu0 %v1646, 127
      %v1742 = vpop.permute.xlu0 %1741
      %1743 = vrot.lane.b32.xlu0 %v1648, 127
      %v1744 = vpop.permute.xlu0 %1743
      %1745 = vrot.lane.b32.xlu0 %v1650, 127
      %v1746 = vpop.permute.xlu0 %1745
      %1747 = vrot.lane.b32.xlu0 %v1652, 127
      %v1748 = vpop.permute.xlu0 %1747
      %1749 = vrot.lane.b32.xlu0 %v1654, 127
      %v1750 = vpop.permute.xlu0 %1749
      %1751 = vrot.lane.b32.xlu0 %v1656, 127
      %v1752 = vpop.permute.xlu0 %1751
      %1753 = vrot.lane.b32.xlu0 %v1658, 127
      %v1754 = vpop.permute.xlu0 %1753
      %1755 = vrot.lane.b32.xlu0 %v1660, 127
      %v1756 = vpop.permute.xlu0 %1755
      %1757 = vrot.lane.b32.xlu0 %v1662, 127
      %v1758 = vpop.permute.xlu0 %1757
      %1759 = vrot.lane.b32.xlu0 %v1664, 127
      %v1760 = vpop.permute.xlu0 %1759
      %1761 = vrot.lane.b32.xlu0 %v1666, 127
      %v1762 = vpop.permute.xlu0 %1761
      %1763 = vrot.lane.b32.xlu0 %v1668, 127
      %v1764 = vpop.permute.xlu0 %1763
      %1765 = vrot.lane.b32.xlu0 %v1670, 127
      %v1766 = vpop.permute.xlu0 %1765
      %1767 = vrot.lane.b32.xlu0 %v1672, 127
      %v1768 = vpop.permute.xlu0 %1767
      %1769 = vrot.lane.b32.xlu0 %v1674, 127
      %v1770 = vpop.permute.xlu0 %1769
      %1771 = vrot.lane.b32.xlu0 %v1676, 127
      %v1772 = vpop.permute.xlu0 %1771
      %1773 = vrot.lane.b32.xlu0 %v1678, 127
      %v1774 = vpop.permute.xlu0 %1773
      %1775 = vrot.lane.b32.xlu0 %v1680, 127
      %v1776 = vpop.permute.xlu0 %1775
      %1777 = vrot.lane.b32.xlu0 %v1682, 127
      %v1778 = vpop.permute.xlu0 %1777
      %1779 = vrot.lane.b32.xlu0 %v1684, 127
      %v1780 = vpop.permute.xlu0 %1779
      %v1813 = vadd.f32 %v1622, %v1718
      %v1814 = vadd.f32 %v1624, %v1720
      %v1815 = vadd.f32 %v1626, %v1722
      %v1816 = vadd.f32 %v1628, %v1724
      %v1817 = vadd.f32 %v1630, %v1726
      %v1818 = vadd.f32 %v1632, %v1728
      %v1819 = vadd.f32 %v1634, %v1730
      %v1820 = vadd.f32 %v1636, %v1732
      %v1821 = vadd.f32 %v1638, %v1734
      %v1822 = vadd.f32 %v1640, %v1736
      %v1823 = vadd.f32 %v1642, %v1738
      %v1824 = vadd.f32 %v1644, %v1740
      %v1825 = vadd.f32 %v1646, %v1742
      %v1826 = vadd.f32 %v1648, %v1744
      %v1827 = vadd.f32 %v1650, %v1746
      %v1828 = vadd.f32 %v1652, %v1748
      %v1829 = vadd.f32 %v1654, %v1750
      %v1830 = vadd.f32 %v1656, %v1752
      %v1831 = vadd.f32 %v1658, %v1754
      %v1832 = vadd.f32 %v1660, %v1756
      %v1833 = vadd.f32 %v1662, %v1758
      %v1834 = vadd.f32 %v1664, %v1760
      %v1835 = vadd.f32 %v1666, %v1762
      %v1836 = vadd.f32 %v1668, %v1764
      %v1837 = vadd.f32 %v1670, %v1766
      %v1838 = vadd.f32 %v1672, %v1768
      %v1839 = vadd.f32 %v1674, %v1770
      %v1840 = vadd.f32 %v1676, %v1772
      %v1841 = vadd.f32 %v1678, %v1774
      %v1842 = vadd.f32 %v1680, %v1776
      %v1843 = vadd.f32 %v1682, %v1778
      %v1844 = vadd.f32 %v1684, %v1780
      %v1845 = vrcp.pop %v1813
      %v1846 = vmul.f32 %v1813, %v1845
      %v1847 = vsub.f32 1.0, %v1846
      %v1848 = vmul.f32 %v1845, %v1847
      %v1849 = vadd.f32 %v1845, %v1848
      %vm1850 = vweird.f32 %v1813
      %vm1851 = vweird.f32 %v1845
      %vm1852 = vmor %vm1850, %vm1851
      %v1853 = vsel %vm1852, %v1845, %v1849
      %v1854 = vand.u32 2147483647, %v1813
      %vm1855 = vcmp.eq.f32.partialorder %v1854, 8.507059e+37
      %v1856 = vand.u32 %v1813, 2147483648
      %v1857 = vor.u32 1.1754944e-38, %v1856
      %v1858 = vsel %vm1855, %v1857, %v1853
      %v1859 = vrcp.pop %v1814
      %v1860 = vmul.f32 %v1814, %v1859
      %v1861 = vsub.f32 1.0, %v1860
      %v1862 = vmul.f32 %v1859, %v1861
      %v1863 = vadd.f32 %v1859, %v1862
      %vm1864 = vweird.f32 %v1814
      %vm1865 = vweird.f32 %v1859
      %vm1866 = vmor %vm1864, %vm1865
      %v1867 = vsel %vm1866, %v1859, %v1863
      %v1868 = vand.u32 2147483647, %v1814
      %vm1869 = vcmp.eq.f32.partialorder %v1868, 8.507059e+37
      %v1870 = vand.u32 %v1814, 2147483648
      %v1871 = vor.u32 1.1754944e-38, %v1870
      %v1872 = vsel %vm1869, %v1871, %v1867
      %v1873 = vrcp.pop %v1815
      %v1874 = vmul.f32 %v1815, %v1873
      %v1875 = vsub.f32 1.0, %v1874
      %v1876 = vmul.f32 %v1873, %v1875
      %v1877 = vadd.f32 %v1873, %v1876
      %vm1878 = vweird.f32 %v1815
      %vm1879 = vweird.f32 %v1873
      %vm1880 = vmor %vm1878, %vm1879
      %v1881 = vsel %vm1880, %v1873, %v1877
      %v1882 = vand.u32 2147483647, %v1815
      %vm1883 = vcmp.eq.f32.partialorder %v1882, 8.507059e+37
      %v1884 = vand.u32 %v1815, 2147483648
      %v1885 = vor.u32 1.1754944e-38, %v1884
      %v1886 = vsel %vm1883, %v1885, %v1881
      %v1887 = vrcp.pop %v1816
      %v1888 = vmul.f32 %v1816, %v1887
      %v1889 = vsub.f32 1.0, %v1888
      %v1890 = vmul.f32 %v1887, %v1889
      %v1891 = vadd.f32 %v1887, %v1890
      %vm1892 = vweird.f32 %v1816
      %vm1893 = vweird.f32 %v1887
      %vm1894 = vmor %vm1892, %vm1893
      %v1895 = vsel %vm1894, %v1887, %v1891
      %v1896 = vand.u32 2147483647, %v1816
      %vm1897 = vcmp.eq.f32.partialorder %v1896, 8.507059e+37
      %v1898 = vand.u32 %v1816, 2147483648
      %v1899 = vor.u32 1.1754944e-38, %v1898
      %v1900 = vsel %vm1897, %v1899, %v1895
      %v1901 = vrcp.pop %v1817
      %v1902 = vmul.f32 %v1817, %v1901
      %v1903 = vsub.f32 1.0, %v1902
      %v1904 = vmul.f32 %v1901, %v1903
      %v1905 = vadd.f32 %v1901, %v1904
      %vm1906 = vweird.f32 %v1817
      %vm1907 = vweird.f32 %v1901
      %vm1908 = vmor %vm1906, %vm1907
      %v1909 = vsel %vm1908, %v1901, %v1905
      %v1910 = vand.u32 2147483647, %v1817
      %vm1911 = vcmp.eq.f32.partialorder %v1910, 8.507059e+37
      %v1912 = vand.u32 %v1817, 2147483648
      %v1913 = vor.u32 1.1754944e-38, %v1912
      %v1914 = vsel %vm1911, %v1913, %v1909
      %v1915 = vrcp.pop %v1818
      %v1916 = vmul.f32 %v1818, %v1915
      %v1917 = vsub.f32 1.0, %v1916
      %v1918 = vmul.f32 %v1915, %v1917
      %v1919 = vadd.f32 %v1915, %v1918
      %vm1920 = vweird.f32 %v1818
      %vm1921 = vweird.f32 %v1915
      %vm1922 = vmor %vm1920, %vm1921
      %v1923 = vsel %vm1922, %v1915, %v1919
      %v1924 = vand.u32 2147483647, %v1818
      %vm1925 = vcmp.eq.f32.partialorder %v1924, 8.507059e+37
      %v1926 = vand.u32 %v1818, 2147483648
      %v1927 = vor.u32 1.1754944e-38, %v1926
      %v1928 = vsel %vm1925, %v1927, %v1923
      %v1929 = vrcp.pop %v1819
      %v1930 = vmul.f32 %v1819, %v1929
      %v1931 = vsub.f32 1.0, %v1930
      %v1932 = vmul.f32 %v1929, %v1931
      %v1933 = vadd.f32 %v1929, %v1932
      %vm1934 = vweird.f32 %v1819
      %vm1935 = vweird.f32 %v1929
      %vm1936 = vmor %vm1934, %vm1935
      %v1937 = vsel %vm1936, %v1929, %v1933
      %v1938 = vand.u32 2147483647, %v1819
      %vm1939 = vcmp.eq.f32.partialorder %v1938, 8.507059e+37
      %v1940 = vand.u32 %v1819, 2147483648
      %v1941 = vor.u32 1.1754944e-38, %v1940
      %v1942 = vsel %vm1939, %v1941, %v1937
      %v1943 = vrcp.pop %v1820
      %v1944 = vmul.f32 %v1820, %v1943
      %v1945 = vsub.f32 1.0, %v1944
      %v1946 = vmul.f32 %v1943, %v1945
      %v1947 = vadd.f32 %v1943, %v1946
      %vm1948 = vweird.f32 %v1820
      %vm1949 = vweird.f32 %v1943
      %vm1950 = vmor %vm1948, %vm1949
      %v1951 = vsel %vm1950, %v1943, %v1947
      %v1952 = vand.u32 2147483647, %v1820
      %vm1953 = vcmp.eq.f32.partialorder %v1952, 8.507059e+37
      %v1954 = vand.u32 %v1820, 2147483648
      %v1955 = vor.u32 1.1754944e-38, %v1954
      %v1956 = vsel %vm1953, %v1955, %v1951
      %v1957 = vrcp.pop %v1821
      %v1958 = vmul.f32 %v1821, %v1957
      %v1959 = vsub.f32 1.0, %v1958
      %v1960 = vmul.f32 %v1957, %v1959
      %v1961 = vadd.f32 %v1957, %v1960
      %vm1962 = vweird.f32 %v1821
      %vm1963 = vweird.f32 %v1957
      %vm1964 = vmor %vm1962, %vm1963
      %v1965 = vsel %vm1964, %v1957, %v1961
      %v1966 = vand.u32 2147483647, %v1821
      %vm1967 = vcmp.eq.f32.partialorder %v1966, 8.507059e+37
      %v1968 = vand.u32 %v1821, 2147483648
      %v1969 = vor.u32 1.1754944e-38, %v1968
      %v1970 = vsel %vm1967, %v1969, %v1965
      %v1971 = vrcp.pop %v1822
      %v1972 = vmul.f32 %v1822, %v1971
      %v1973 = vsub.f32 1.0, %v1972
      %v1974 = vmul.f32 %v1971, %v1973
      %v1975 = vadd.f32 %v1971, %v1974
      %vm1976 = vweird.f32 %v1822
      %vm1977 = vweird.f32 %v1971
      %vm1978 = vmor %vm1976, %vm1977
      %v1979 = vsel %vm1978, %v1971, %v1975
      %v1980 = vand.u32 2147483647, %v1822
      %vm1981 = vcmp.eq.f32.partialorder %v1980, 8.507059e+37
      %v1982 = vand.u32 %v1822, 2147483648
      %v1983 = vor.u32 1.1754944e-38, %v1982
      %v1984 = vsel %vm1981, %v1983, %v1979
      %v1985 = vrcp.pop %v1823
      %v1986 = vmul.f32 %v1823, %v1985
      %v1987 = vsub.f32 1.0, %v1986
      %v1988 = vmul.f32 %v1985, %v1987
      %v1989 = vadd.f32 %v1985, %v1988
      %vm1990 = vweird.f32 %v1823
      %vm1991 = vweird.f32 %v1985
      %vm1992 = vmor %vm1990, %vm1991
      %v1993 = vsel %vm1992, %v1985, %v1989
      %v1994 = vand.u32 2147483647, %v1823
      %vm1995 = vcmp.eq.f32.partialorder %v1994, 8.507059e+37
      %v1996 = vand.u32 %v1823, 2147483648
      %v1997 = vor.u32 1.1754944e-38, %v1996
      %v1998 = vsel %vm1995, %v1997, %v1993
      %v1999 = vrcp.pop %v1824
      %v2000 = vmul.f32 %v1824, %v1999
      %v2001 = vsub.f32 1.0, %v2000
      %v2002 = vmul.f32 %v1999, %v2001
      %v2003 = vadd.f32 %v1999, %v2002
      %vm2004 = vweird.f32 %v1824
      %vm2005 = vweird.f32 %v1999
      %vm2006 = vmor %vm2004, %vm2005
      %v2007 = vsel %vm2006, %v1999, %v2003
      %v2008 = vand.u32 2147483647, %v1824
      %vm2009 = vcmp.eq.f32.partialorder %v2008, 8.507059e+37
      %v2010 = vand.u32 %v1824, 2147483648
      %v2011 = vor.u32 1.1754944e-38, %v2010
      %v2012 = vsel %vm2009, %v2011, %v2007
      %v2013 = vrcp.pop %v1825
      %v2014 = vmul.f32 %v1825, %v2013
      %v2015 = vsub.f32 1.0, %v2014
      %v2016 = vmul.f32 %v2013, %v2015
      %v2017 = vadd.f32 %v2013, %v2016
      %vm2018 = vweird.f32 %v1825
      %vm2019 = vweird.f32 %v2013
      %vm2020 = vmor %vm2018, %vm2019
      %v2021 = vsel %vm2020, %v2013, %v2017
      %v2022 = vand.u32 2147483647, %v1825
      %vm2023 = vcmp.eq.f32.partialorder %v2022, 8.507059e+37
      %v2024 = vand.u32 %v1825, 2147483648
      %v2025 = vor.u32 1.1754944e-38, %v2024
      %v2026 = vsel %vm2023, %v2025, %v2021
      %v2027 = vrcp.pop %v1826
      %v2028 = vmul.f32 %v1826, %v2027
      %v2029 = vsub.f32 1.0, %v2028
      %v2030 = vmul.f32 %v2027, %v2029
      %v2031 = vadd.f32 %v2027, %v2030
      %vm2032 = vweird.f32 %v1826
      %vm2033 = vweird.f32 %v2027
      %vm2034 = vmor %vm2032, %vm2033
      %v2035 = vsel %vm2034, %v2027, %v2031
      %v2036 = vand.u32 2147483647, %v1826
      %vm2037 = vcmp.eq.f32.partialorder %v2036, 8.507059e+37
      %v2038 = vand.u32 %v1826, 2147483648
      %v2039 = vor.u32 1.1754944e-38, %v2038
      %v2040 = vsel %vm2037, %v2039, %v2035
      %v2041 = vrcp.pop %v1827
      %v2042 = vmul.f32 %v1827, %v2041
      %v2043 = vsub.f32 1.0, %v2042
      %v2044 = vmul.f32 %v2041, %v2043
      %v2045 = vadd.f32 %v2041, %v2044
      %vm2046 = vweird.f32 %v1827
      %vm2047 = vweird.f32 %v2041
      %vm2048 = vmor %vm2046, %vm2047
      %v2049 = vsel %vm2048, %v2041, %v2045
      %v2050 = vand.u32 2147483647, %v1827
      %vm2051 = vcmp.eq.f32.partialorder %v2050, 8.507059e+37
      %v2052 = vand.u32 %v1827, 2147483648
      %v2053 = vor.u32 1.1754944e-38, %v2052
      %v2054 = vsel %vm2051, %v2053, %v2049
      %v2055 = vrcp.pop %v1828
      %v2056 = vmul.f32 %v1828, %v2055
      %v2057 = vsub.f32 1.0, %v2056
      %v2058 = vmul.f32 %v2055, %v2057
      %v2059 = vadd.f32 %v2055, %v2058
      %vm2060 = vweird.f32 %v1828
      %vm2061 = vweird.f32 %v2055
      %vm2062 = vmor %vm2060, %vm2061
      %v2063 = vsel %vm2062, %v2055, %v2059
      %v2064 = vand.u32 2147483647, %v1828
      %vm2065 = vcmp.eq.f32.partialorder %v2064, 8.507059e+37
      %v2066 = vand.u32 %v1828, 2147483648
      %v2067 = vor.u32 1.1754944e-38, %v2066
      %v2068 = vsel %vm2065, %v2067, %v2063
      %v2069 = vrcp.pop %v1829
      %v2070 = vmul.f32 %v1829, %v2069
      %v2071 = vsub.f32 1.0, %v2070
      %v2072 = vmul.f32 %v2069, %v2071
      %v2073 = vadd.f32 %v2069, %v2072
      %vm2074 = vweird.f32 %v1829
      %vm2075 = vweird.f32 %v2069
      %vm2076 = vmor %vm2074, %vm2075
      %v2077 = vsel %vm2076, %v2069, %v2073
      %v2078 = vand.u32 2147483647, %v1829
      %vm2079 = vcmp.eq.f32.partialorder %v2078, 8.507059e+37
      %v2080 = vand.u32 %v1829, 2147483648
      %v2081 = vor.u32 1.1754944e-38, %v2080
      %v2082 = vsel %vm2079, %v2081, %v2077
      %v2083 = vrcp.pop %v1830
      %v2084 = vmul.f32 %v1830, %v2083
      %v2085 = vsub.f32 1.0, %v2084
      %v2086 = vmul.f32 %v2083, %v2085
      %v2087 = vadd.f32 %v2083, %v2086
      %vm2088 = vweird.f32 %v1830
      %vm2089 = vweird.f32 %v2083
      %vm2090 = vmor %vm2088, %vm2089
      %v2091 = vsel %vm2090, %v2083, %v2087
      %v2092 = vand.u32 2147483647, %v1830
      %vm2093 = vcmp.eq.f32.partialorder %v2092, 8.507059e+37
      %v2094 = vand.u32 %v1830, 2147483648
      %v2095 = vor.u32 1.1754944e-38, %v2094
      %v2096 = vsel %vm2093, %v2095, %v2091
      %v2097 = vrcp.pop %v1831
      %v2098 = vmul.f32 %v1831, %v2097
      %v2099 = vsub.f32 1.0, %v2098
      %v2100 = vmul.f32 %v2097, %v2099
      %v2101 = vadd.f32 %v2097, %v2100
      %vm2102 = vweird.f32 %v1831
      %vm2103 = vweird.f32 %v2097
      %vm2104 = vmor %vm2102, %vm2103
      %v2105 = vsel %vm2104, %v2097, %v2101
      %v2106 = vand.u32 2147483647, %v1831
      %vm2107 = vcmp.eq.f32.partialorder %v2106, 8.507059e+37
      %v2108 = vand.u32 %v1831, 2147483648
      %v2109 = vor.u32 1.1754944e-38, %v2108
      %v2110 = vsel %vm2107, %v2109, %v2105
      %v2111 = vrcp.pop %v1832
      %v2112 = vmul.f32 %v1832, %v2111
      %v2113 = vsub.f32 1.0, %v2112
      %v2114 = vmul.f32 %v2111, %v2113
      %v2115 = vadd.f32 %v2111, %v2114
      %vm2116 = vweird.f32 %v1832
      %vm2117 = vweird.f32 %v2111
      %vm2118 = vmor %vm2116, %vm2117
      %v2119 = vsel %vm2118, %v2111, %v2115
      %v2120 = vand.u32 2147483647, %v1832
      %vm2121 = vcmp.eq.f32.partialorder %v2120, 8.507059e+37
      %v2122 = vand.u32 %v1832, 2147483648
      %v2123 = vor.u32 1.1754944e-38, %v2122
      %v2124 = vsel %vm2121, %v2123, %v2119
      %v2125 = vrcp.pop %v1833
      %v2126 = vmul.f32 %v1833, %v2125
      %v2127 = vsub.f32 1.0, %v2126
      %v2128 = vmul.f32 %v2125, %v2127
      %v2129 = vadd.f32 %v2125, %v2128
      %vm2130 = vweird.f32 %v1833
      %vm2131 = vweird.f32 %v2125
      %vm2132 = vmor %vm2130, %vm2131
      %v2133 = vsel %vm2132, %v2125, %v2129
      %v2134 = vand.u32 2147483647, %v1833
      %vm2135 = vcmp.eq.f32.partialorder %v2134, 8.507059e+37
      %v2136 = vand.u32 %v1833, 2147483648
      %v2137 = vor.u32 1.1754944e-38, %v2136
      %v2138 = vsel %vm2135, %v2137, %v2133
      %v2139 = vrcp.pop %v1834
      %v2140 = vmul.f32 %v1834, %v2139
      %v2141 = vsub.f32 1.0, %v2140
      %v2142 = vmul.f32 %v2139, %v2141
      %v2143 = vadd.f32 %v2139, %v2142
      %vm2144 = vweird.f32 %v1834
      %vm2145 = vweird.f32 %v2139
      %vm2146 = vmor %vm2144, %vm2145
      %v2147 = vsel %vm2146, %v2139, %v2143
      %v2148 = vand.u32 2147483647, %v1834
      %vm2149 = vcmp.eq.f32.partialorder %v2148, 8.507059e+37
      %v2150 = vand.u32 %v1834, 2147483648
      %v2151 = vor.u32 1.1754944e-38, %v2150
      %v2152 = vsel %vm2149, %v2151, %v2147
      %v2153 = vrcp.pop %v1835
      %v2154 = vmul.f32 %v1835, %v2153
      %v2155 = vsub.f32 1.0, %v2154
      %v2156 = vmul.f32 %v2153, %v2155
      %v2157 = vadd.f32 %v2153, %v2156
      %vm2158 = vweird.f32 %v1835
      %vm2159 = vweird.f32 %v2153
      %vm2160 = vmor %vm2158, %vm2159
      %v2161 = vsel %vm2160, %v2153, %v2157
      %v2162 = vand.u32 2147483647, %v1835
      %vm2163 = vcmp.eq.f32.partialorder %v2162, 8.507059e+37
      %v2164 = vand.u32 %v1835, 2147483648
      %v2165 = vor.u32 1.1754944e-38, %v2164
      %v2166 = vsel %vm2163, %v2165, %v2161
      %v2167 = vrcp.pop %v1836
      %v2168 = vmul.f32 %v1836, %v2167
      %v2169 = vsub.f32 1.0, %v2168
      %v2170 = vmul.f32 %v2167, %v2169
      %v2171 = vadd.f32 %v2167, %v2170
      %vm2172 = vweird.f32 %v1836
      %vm2173 = vweird.f32 %v2167
      %vm2174 = vmor %vm2172, %vm2173
      %v2175 = vsel %vm2174, %v2167, %v2171
      %v2176 = vand.u32 2147483647, %v1836
      %vm2177 = vcmp.eq.f32.partialorder %v2176, 8.507059e+37
      %v2178 = vand.u32 %v1836, 2147483648
      %v2179 = vor.u32 1.1754944e-38, %v2178
      %v2180 = vsel %vm2177, %v2179, %v2175
      %v2181 = vrcp.pop %v1837
      %v2182 = vmul.f32 %v1837, %v2181
      %v2183 = vsub.f32 1.0, %v2182
      %v2184 = vmul.f32 %v2181, %v2183
      %v2185 = vadd.f32 %v2181, %v2184
      %vm2186 = vweird.f32 %v1837
      %vm2187 = vweird.f32 %v2181
      %vm2188 = vmor %vm2186, %vm2187
      %v2189 = vsel %vm2188, %v2181, %v2185
      %v2190 = vand.u32 2147483647, %v1837
      %vm2191 = vcmp.eq.f32.partialorder %v2190, 8.507059e+37
      %v2192 = vand.u32 %v1837, 2147483648
      %v2193 = vor.u32 1.1754944e-38, %v2192
      %v2194 = vsel %vm2191, %v2193, %v2189
      %v2195 = vrcp.pop %v1838
      %v2196 = vmul.f32 %v1838, %v2195
      %v2197 = vsub.f32 1.0, %v2196
      %v2198 = vmul.f32 %v2195, %v2197
      %v2199 = vadd.f32 %v2195, %v2198
      %vm2200 = vweird.f32 %v1838
      %vm2201 = vweird.f32 %v2195
      %vm2202 = vmor %vm2200, %vm2201
      %v2203 = vsel %vm2202, %v2195, %v2199
      %v2204 = vand.u32 2147483647, %v1838
      %vm2205 = vcmp.eq.f32.partialorder %v2204, 8.507059e+37
      %v2206 = vand.u32 %v1838, 2147483648
      %v2207 = vor.u32 1.1754944e-38, %v2206
      %v2208 = vsel %vm2205, %v2207, %v2203
      %v2209 = vrcp.pop %v1839
      %v2210 = vmul.f32 %v1839, %v2209
      %v2211 = vsub.f32 1.0, %v2210
      %v2212 = vmul.f32 %v2209, %v2211
      %v2213 = vadd.f32 %v2209, %v2212
      %vm2214 = vweird.f32 %v1839
      %vm2215 = vweird.f32 %v2209
      %vm2216 = vmor %vm2214, %vm2215
      %v2217 = vsel %vm2216, %v2209, %v2213
      %v2218 = vand.u32 2147483647, %v1839
      %vm2219 = vcmp.eq.f32.partialorder %v2218, 8.507059e+37
      %v2220 = vand.u32 %v1839, 2147483648
      %v2221 = vor.u32 1.1754944e-38, %v2220
      %v2222 = vsel %vm2219, %v2221, %v2217
      %v2223 = vrcp.pop %v1840
      %v2224 = vmul.f32 %v1840, %v2223
      %v2225 = vsub.f32 1.0, %v2224
      %v2226 = vmul.f32 %v2223, %v2225
      %v2227 = vadd.f32 %v2223, %v2226
      %vm2228 = vweird.f32 %v1840
      %vm2229 = vweird.f32 %v2223
      %vm2230 = vmor %vm2228, %vm2229
      %v2231 = vsel %vm2230, %v2223, %v2227
      %v2232 = vand.u32 2147483647, %v1840
      %vm2233 = vcmp.eq.f32.partialorder %v2232, 8.507059e+37
      %v2234 = vand.u32 %v1840, 2147483648
      %v2235 = vor.u32 1.1754944e-38, %v2234
      %v2236 = vsel %vm2233, %v2235, %v2231
      %v2237 = vrcp.pop %v1841
      %v2238 = vmul.f32 %v1841, %v2237
      %v2239 = vsub.f32 1.0, %v2238
      %v2240 = vmul.f32 %v2237, %v2239
      %v2241 = vadd.f32 %v2237, %v2240
      %vm2242 = vweird.f32 %v1841
      %vm2243 = vweird.f32 %v2237
      %vm2244 = vmor %vm2242, %vm2243
      %v2245 = vsel %vm2244, %v2237, %v2241
      %v2246 = vand.u32 2147483647, %v1841
      %vm2247 = vcmp.eq.f32.partialorder %v2246, 8.507059e+37
      %v2248 = vand.u32 %v1841, 2147483648
      %v2249 = vor.u32 1.1754944e-38, %v2248
      %v2250 = vsel %vm2247, %v2249, %v2245
      %v2251 = vrcp.pop %v1842
      %v2252 = vmul.f32 %v1842, %v2251
      %v2253 = vsub.f32 1.0, %v2252
      %v2254 = vmul.f32 %v2251, %v2253
      %v2255 = vadd.f32 %v2251, %v2254
      %vm2256 = vweird.f32 %v1842
      %vm2257 = vweird.f32 %v2251
      %vm2258 = vmor %vm2256, %vm2257
      %v2259 = vsel %vm2258, %v2251, %v2255
      %v2260 = vand.u32 2147483647, %v1842
      %vm2261 = vcmp.eq.f32.partialorder %v2260, 8.507059e+37
      %v2262 = vand.u32 %v1842, 2147483648
      %v2263 = vor.u32 1.1754944e-38, %v2262
      %v2264 = vsel %vm2261, %v2263, %v2259
      %v2265 = vrcp.pop %v1843
      %v2266 = vmul.f32 %v1843, %v2265
      %v2267 = vsub.f32 1.0, %v2266
      %v2268 = vmul.f32 %v2265, %v2267
      %v2269 = vadd.f32 %v2265, %v2268
      %vm2270 = vweird.f32 %v1843
      %vm2271 = vweird.f32 %v2265
      %vm2272 = vmor %vm2270, %vm2271
      %v2273 = vsel %vm2272, %v2265, %v2269
      %v2274 = vand.u32 2147483647, %v1843
      %vm2275 = vcmp.eq.f32.partialorder %v2274, 8.507059e+37
      %v2276 = vand.u32 %v1843, 2147483648
      %v2277 = vor.u32 1.1754944e-38, %v2276
      %v2278 = vsel %vm2275, %v2277, %v2273
      %v2279 = vrcp.pop %v1844
      %v2280 = vmul.f32 %v1844, %v2279
      %v2281 = vsub.f32 1.0, %v2280
      %v2282 = vmul.f32 %v2279, %v2281
      %v2283 = vadd.f32 %v2279, %v2282
      %vm2284 = vweird.f32 %v1844
      %vm2285 = vweird.f32 %v2279
      %vm2286 = vmor %vm2284, %vm2285
      %v2287 = vsel %vm2286, %v2279, %v2283
      %v2288 = vand.u32 2147483647, %v1844
      %vm2289 = vcmp.eq.f32.partialorder %v2288, 8.507059e+37
      %v2290 = vand.u32 %v1844, 2147483648
      %v2291 = vor.u32 1.1754944e-38, %v2290
      %v2292 = vsel %vm2289, %v2291, %v2287
      %2294 = vset.pattern.permute.xlu0 0
      %2295 = vperm.xlu0 %2294, %v1858
      %v2296 = vpop.permute.xlu0 %2295
      %2299 = vset.pattern.permute.xlu0 0
      %2300 = vperm.xlu0 %2299, %v1872
      %v2301 = vpop.permute.xlu0 %2300
      %2304 = vset.pattern.permute.xlu0 0
      %2305 = vperm.xlu0 %2304, %v1886
      %v2306 = vpop.permute.xlu0 %2305
      %2309 = vset.pattern.permute.xlu0 0
      %2310 = vperm.xlu0 %2309, %v1900
      %v2311 = vpop.permute.xlu0 %2310
      %2314 = vset.pattern.permute.xlu0 0
      %2315 = vperm.xlu0 %2314, %v1914
      %v2316 = vpop.permute.xlu0 %2315
      %2319 = vset.pattern.permute.xlu0 0
      %2320 = vperm.xlu0 %2319, %v1928
      %v2321 = vpop.permute.xlu0 %2320
      %2324 = vset.pattern.permute.xlu0 0
      %2325 = vperm.xlu0 %2324, %v1942
      %v2326 = vpop.permute.xlu0 %2325
      %2329 = vset.pattern.permute.xlu0 0
      %2330 = vperm.xlu0 %2329, %v1956
      %v2331 = vpop.permute.xlu0 %2330
      %2334 = vset.pattern.permute.xlu0 0
      %2335 = vperm.xlu0 %2334, %v1970
      %v2336 = vpop.permute.xlu0 %2335
      %2339 = vset.pattern.permute.xlu0 0
      %2340 = vperm.xlu0 %2339, %v1984
      %v2341 = vpop.permute.xlu0 %2340
      %2344 = vset.pattern.permute.xlu0 0
      %2345 = vperm.xlu0 %2344, %v1998
      %v2346 = vpop.permute.xlu0 %2345
      %2349 = vset.pattern.permute.xlu0 0
      %2350 = vperm.xlu0 %2349, %v2012
      %v2351 = vpop.permute.xlu0 %2350
      %2354 = vset.pattern.permute.xlu0 0
      %2355 = vperm.xlu0 %2354, %v2026
      %v2356 = vpop.permute.xlu0 %2355
      %2359 = vset.pattern.permute.xlu0 0
      %2360 = vperm.xlu0 %2359, %v2040
      %v2361 = vpop.permute.xlu0 %2360
      %2364 = vset.pattern.permute.xlu0 0
      %2365 = vperm.xlu0 %2364, %v2054
      %v2366 = vpop.permute.xlu0 %2365
      %2369 = vset.pattern.permute.xlu0 0
      %2370 = vperm.xlu0 %2369, %v2068
      %v2371 = vpop.permute.xlu0 %2370
      %2374 = vset.pattern.permute.xlu0 0
      %2375 = vperm.xlu0 %2374, %v2082
      %v2376 = vpop.permute.xlu0 %2375
      %2379 = vset.pattern.permute.xlu0 0
      %2380 = vperm.xlu0 %2379, %v2096
      %v2381 = vpop.permute.xlu0 %2380
      %2384 = vset.pattern.permute.xlu0 0
      %2385 = vperm.xlu0 %2384, %v2110
      %v2386 = vpop.permute.xlu0 %2385
      %2389 = vset.pattern.permute.xlu0 0
      %2390 = vperm.xlu0 %2389, %v2124
      %v2391 = vpop.permute.xlu0 %2390
      %2394 = vset.pattern.permute.xlu0 0
      %2395 = vperm.xlu0 %2394, %v2138
      %v2396 = vpop.permute.xlu0 %2395
      %2399 = vset.pattern.permute.xlu0 0
      %2400 = vperm.xlu0 %2399, %v2152
      %v2401 = vpop.permute.xlu0 %2400
      %2404 = vset.pattern.permute.xlu0 0
      %2405 = vperm.xlu0 %2404, %v2166
      %v2406 = vpop.permute.xlu0 %2405
      %2409 = vset.pattern.permute.xlu0 0
      %2410 = vperm.xlu0 %2409, %v2180
      %v2411 = vpop.permute.xlu0 %2410
      %2414 = vset.pattern.permute.xlu0 0
      %2415 = vperm.xlu0 %2414, %v2194
      %v2416 = vpop.permute.xlu0 %2415
      %2419 = vset.pattern.permute.xlu0 0
      %2420 = vperm.xlu0 %2419, %v2208
      %v2421 = vpop.permute.xlu0 %2420
      %2424 = vset.pattern.permute.xlu0 0
      %2425 = vperm.xlu0 %2424, %v2222
      %v2426 = vpop.permute.xlu0 %2425
      %2429 = vset.pattern.permute.xlu0 0
      %2430 = vperm.xlu0 %2429, %v2236
      %v2431 = vpop.permute.xlu0 %2430
      %2434 = vset.pattern.permute.xlu0 0
      %2435 = vperm.xlu0 %2434, %v2250
      %v2436 = vpop.permute.xlu0 %2435
      %2439 = vset.pattern.permute.xlu0 0
      %2440 = vperm.xlu0 %2439, %v2264
      %v2441 = vpop.permute.xlu0 %2440
      %2444 = vset.pattern.permute.xlu0 0
      %2445 = vperm.xlu0 %2444, %v2278
      %v2446 = vpop.permute.xlu0 %2445
      %2449 = vset.pattern.permute.xlu0 0
      %2450 = vperm.xlu0 %2449, %v2292
      %v2451 = vpop.permute.xlu0 %2450
      %v2453 = vmul.f32 %v1622, %v2296
      %v2454 = vmul.f32 %v1624, %v2301
      %v2455 = vmul.f32 %v1626, %v2306
      %v2456 = vmul.f32 %v1628, %v2311
      %v2457 = vmul.f32 %v1630, %v2316
      %v2458 = vmul.f32 %v1632, %v2321
      %v2459 = vmul.f32 %v1634, %v2326
      %v2460 = vmul.f32 %v1636, %v2331
      %v2461 = vmul.f32 %v1638, %v2336
      %v2462 = vmul.f32 %v1640, %v2341
      %v2463 = vmul.f32 %v1642, %v2346
      %v2464 = vmul.f32 %v1644, %v2351
      %v2465 = vmul.f32 %v1646, %v2356
      %v2466 = vmul.f32 %v1648, %v2361
      %v2467 = vmul.f32 %v1650, %v2366
      %v2468 = vmul.f32 %v1652, %v2371
      %v2469 = vmul.f32 %v1654, %v2376
      %v2470 = vmul.f32 %v1656, %v2381
      %v2471 = vmul.f32 %v1658, %v2386
      %v2472 = vmul.f32 %v1660, %v2391
      %v2473 = vmul.f32 %v1662, %v2396
      %v2474 = vmul.f32 %v1664, %v2401
      %v2475 = vmul.f32 %v1666, %v2406
      %v2476 = vmul.f32 %v1668, %v2411
      %v2477 = vmul.f32 %v1670, %v2416
      %v2478 = vmul.f32 %v1672, %v2421
      %v2479 = vmul.f32 %v1674, %v2426
      %v2480 = vmul.f32 %v1676, %v2431
      %v2481 = vmul.f32 %v1678, %v2436
      %v2482 = vmul.f32 %v1680, %v2441
      %v2483 = vmul.f32 %v1682, %v2446
      %v2484 = vmul.f32 %v1684, %v2451
      %vm2485 = vcmask 15360
      %2486 = vst.msk [vmem:[%s145] sm:$0xff] %vm2485, %v2453
      %2487 = vst.msk [vmem:[%s145 + $0x8] sm:$0xff] %vm2485, %v2454
      %2488 = vst.msk [vmem:[%s145 + $0x10] sm:$0xff] %vm2485, %v2455
      %2489 = vst.msk [vmem:[%s145 + $0x18] sm:$0xff] %vm2485, %v2456
      %2490 = vst.msk [vmem:[%s145 + $0x20] sm:$0xff] %vm2485, %v2457
      %2491 = vst.msk [vmem:[%s145 + $0x28] sm:$0xff] %vm2485, %v2458
      %2492 = vst.msk [vmem:[%s145 + $0x30] sm:$0xff] %vm2485, %v2459
      %2493 = vst.msk [vmem:[%s145 + $0x38] sm:$0xff] %vm2485, %v2460
      %2494 = vst.msk [vmem:[%s145 + $0x40] sm:$0xff] %vm2485, %v2461
      %2495 = vst.msk [vmem:[%s145 + $0x48] sm:$0xff] %vm2485, %v2462
      %2496 = vst.msk [vmem:[%s145 + $0x50] sm:$0xff] %vm2485, %v2463
      %2497 = vst.msk [vmem:[%s145 + $0x58] sm:$0xff] %vm2485, %v2464
      %2498 = vst.msk [vmem:[%s145 + $0x60] sm:$0xff] %vm2485, %v2465
      %2499 = vst.msk [vmem:[%s145 + $0x68] sm:$0xff] %vm2485, %v2466
      %2500 = vst.msk [vmem:[%s145 + $0x70] sm:$0xff] %vm2485, %v2467
      %2501 = vst.msk [vmem:[%s145 + $0x78] sm:$0xff] %vm2485, %v2468
      %2502 = vst.msk [vmem:[%s145 + $0x80] sm:$0xff] %vm2485, %v2469
      %2503 = vst.msk [vmem:[%s145 + $0x88] sm:$0xff] %vm2485, %v2470
      %2504 = vst.msk [vmem:[%s145 + $0x90] sm:$0xff] %vm2485, %v2471
      %2505 = vst.msk [vmem:[%s145 + $0x98] sm:$0xff] %vm2485, %v2472
      %2506 = vst.msk [vmem:[%s145 + $0xa0] sm:$0xff] %vm2485, %v2473
      %2507 = vst.msk [vmem:[%s145 + $0xa8] sm:$0xff] %vm2485, %v2474
      %2508 = vst.msk [vmem:[%s145 + $0xb0] sm:$0xff] %vm2485, %v2475
      %2509 = vst.msk [vmem:[%s145 + $0xb8] sm:$0xff] %vm2485, %v2476
      %2510 = vst.msk [vmem:[%s145 + $0xc0] sm:$0xff] %vm2485, %v2477
      %2511 = vst.msk [vmem:[%s145 + $0xc8] sm:$0xff] %vm2485, %v2478
      %2512 = vst.msk [vmem:[%s145 + $0xd0] sm:$0xff] %vm2485, %v2479
      %2513 = vst.msk [vmem:[%s145 + $0xd8] sm:$0xff] %vm2485, %v2480
      %2514 = vst.msk [vmem:[%s145 + $0xe0] sm:$0xff] %vm2485, %v2481
      %2515 = vst.msk [vmem:[%s145 + $0xe8] sm:$0xff] %vm2485, %v2482
      %2516 = vst.msk [vmem:[%s145 + $0xf0] sm:$0xff] %vm2485, %v2483
      %2517 = vst.msk [vmem:[%s145 + $0xf8] sm:$0xff] %vm2485, %v2484
      %s2518 = smul.u32 32, %s13
      %p2519 = scmp.lt.s32.totalorder %s2518, 63
      %s2520 = scalar_select %p2519, %s2518, 63
      %s2521 = smul.addr %s2520, 8
      %s2522 = scalar_lea.vmem %s2, %s2521
      // Predicated region
      $region29: #{actor_forward.1} parent=27 // pred_check
        %p2523 = pneg %p78
      $region30: #{actor_forward.1} parent=27 // pred_check_branch
        %2525 = sbr.rel (%p2523) target = $region32
      $region31: #{actor_forward.1} parent=27 // pred_region
        %s2526 = smul.u32 32, %s13
      $region32: #{actor_forward.1} parent=27 // pred_fallthru
        _
    $region28: #{actor_forward.1} parent=5 // pred_fallthru
      _
    %p2527 = scmp.le.s32.totalorder 2, %s8
    // Predicated region
    $region33: #{actor_forward.1} parent=5 // pred_check
      %p2528 = pneg %p2527
    $region34: #{actor_forward.1} parent=5 // pred_check_branch
      %2530 = sbr.rel (%p2528) target = $region36
    $region35: #{actor_forward.1} parent=5 // pred_region
      %s2531 = ssub.s32 %s8, 2
      // Predicated region
      $region37: #{actor_forward.1} parent=35 // pred_check
        %p2532 = pneg %p84
      $region38: #{actor_forward.1} parent=35 // pred_check_branch
        %2534 = sbr.rel (%p2532) target = $region40
      $region39: #{actor_forward.1} parent=35 // pred_region
        %s2535 = smul.u32 32, %s14
        %p2536 = scmp.lt.s32.totalorder %s2535, 63
        %s2537 = scalar_select %p2536, %s2535, 63
        %s2538 = smul.addr %s2537, 8
        %s2539 = scalar_lea.vmem %s2, %s2538
      $region40: #{actor_forward.1} parent=35 // pred_fallthru
        _
    $region36: #{actor_forward.1} parent=5 // pred_fallthru
      _
  $region6: #{actor_forward.1} parent=0 // loop_footer
    %s12 = sadd.s32 1, %s8
  $region7: #{actor_forward.1} parent=0 // loop_footer_branch
    %7 = sbr.rel target = $region3
  $region8: #{actor_forward.1} parent=0 // loop_exit
    _

</llo_original>
